<compile_context>
chip_gen: v6e
topology: v6e:2x2x1
jax: 0.10.0
libtpu: 0.0.40
codegen_flags: <defaults>
</compile_context>

<pallas_src>
import functools

import jax
import jax.numpy as jnp
from jax import lax
from jax.experimental import pallas as pl
from jax.experimental.pallas import tpu as pltpu


# ----------------------------------------------------------------------------
# In-kernel exact-erf GELU (rational erf approximation; only elementwise + exp).
# ----------------------------------------------------------------------------
def _erf_approx(x):
    # Abramowitz & Stegun 7.1.26, max abs error ~1.5e-7.
    p = 0.3275911
    a1, a2, a3, a4, a5 = 0.254829592, -0.284496736, 1.421413741, -1.453152027, 1.061405429
    ax = jnp.abs(x)
    t = 1.0 / (1.0 + p * ax)
    poly = t * (a1 + t * (a2 + t * (a3 + t * (a4 + t * a5))))
    y = 1.0 - poly * jnp.exp(-(ax * ax))
    return jnp.where(x >= 0.0, y, -y)


def _gelu_erf(x):
    # torch.nn.functional.gelu default (exact erf form), up to the erf approximation.
    return 0.5 * x * (1.0 + _erf_approx(x * 0.7071067811865476))


# ----------------------------------------------------------------------------
# Fused kernel: standardization + preget (theta/GELU/xil) + forward_process +
#               dec_new + both Projectors (circular conv + MLP, exp(tau) fused).
# Block layout: x block = [bB, L, E] (native torch layout, E on lanes).
# ----------------------------------------------------------------------------
def _make_fused_kernel(label_len, pred_len):
    def kernel(x_ref, ml_ref, gamma_ref, beta_ref,
               cwt_ref, tw1_ref, tb1_ref, tw2_ref, tb2_ref, tw3_ref,
               cwd_ref, dw1_ref, db1_ref, dw2_ref, db2_ref, dw3_ref,
               out_ref, dec_ref, tau_ref, delta_ref):
        x = x_ref[...]                                    # [bB, L, E]  x_raw
        bB, L, E = x.shape

        # ---- standardization statistics along seq_len (sublane axis) ----
        mean = jnp.mean(x, axis=1, keepdims=True)         # [bB, 1, E]  mean_enc
        c = x - mean
        var = jnp.mean(c * c, axis=1, keepdims=True)      # unbiased=False (/L)
        inv_std = lax.rsqrt(var + 1e-5)                   # EUP rsqrt, no full-size divide
        bx = c * inv_std                                  # normalized series

        # ---- preget: theta_low -> GELU -> xil ----
        thl = jnp.sum(bx * ml_ref[...][None], axis=1, keepdims=True)   # [bB, 1, E]
        phil = _gelu_erf(thl)                             # GELU fused in-kernel
        dl = bx - phil
        xil = jnp.sum(dl * dl, axis=1, keepdims=True) * (1.0 / (L - 1))  # /(L-1) as in torch
        gs = gamma_ref[...] * lax.rsqrt(xil + 1e-8)       # gamma / sqrt(xil + 1e-8)
        beta = beta_ref[...]

        # ---- forward_process(batch_x) ----
        out = dl * gs + beta
        out_ref[...] = out

        # ---- dec_new = forward_process(cat([bx[:, :label_len], zeros(pred_len)])) ----
        zero_col = beta - phil * gs                       # forward_process(0), [bB, 1, E]
        if label_len > 0:
            dec_ref[:, :label_len, :] = out[:, :label_len, :]
        if pred_len > 0:
            dec_ref[:, label_len:, :] = jnp.broadcast_to(zero_col, (bB, pred_len, E))

        # ---- Projectors: inputs are x_raw + std_enc / mean_enc (as in torch) ----
        # circular Conv1d(seq_len -> 1, k=3) over enc_in:
        #   conv[b, e] = r0[b,(e-1)%E] + r1[b,e] + r2[b,(e+1)%E]
        #   with r_k[b, e] = sum_l x[b, l, e] * w[l, k]  (circular shift commuted past
        #   the seq_len reduce, so it acts on tiny [bB, E] tiles).
        cwt = cwt_ref[...]                                # [L, 3]  tau conv weights
        cwd = cwd_ref[...]                                # [L, 3]  delta conv weights

        def tap(w_col):                                   # [L, 1] -> [bB, E]
            return jnp.sum(x * w_col[None, :, :], axis=1)

        def roll_m1(r):                                   # r[:, (e-1) % E]
            return jnp.concatenate([r[:, E - 1:], r[:, :E - 1]], axis=-1)

        def roll_p1(r):                                   # r[:, (e+1) % E]
            return jnp.concatenate([r[:, 1:], r[:, :1]], axis=-1)

        def circ_conv(cw):
            return roll_m1(tap(cw[:, 0:1])) + tap(cw[:, 1:2]) + roll_p1(tap(cw[:, 2:3]))

        conv_t = circ_conv(cwt)                           # [bB, E]
        conv_d = circ_conv(cwd)                           # [bB, E]

        # stats features reuse the already-computed mean / var (no extra block reduces)
        std2 = jnp.sqrt(var[:, 0, :] + 1e-5)              # [bB, E]  == std_enc
        mean2 = mean[:, 0, :]                             # [bB, E]  == mean_enc

        def mlp(feat, w1, b1, w2, b2, w3):
            h = jnp.maximum(jnp.dot(feat, w1, preferred_element_type=jnp.float32) + b1, 0.0)
            h = jnp.maximum(jnp.dot(h, w2, preferred_element_type=jnp.float32) + b2, 0.0)
            return jnp.dot(h, w3, preferred_element_type=jnp.float32)

        # torch: cat([conv, stats], dim=1).view(B, -1)  -> conv features first
        y_tau = mlp(jnp.concatenate([conv_t, std2], axis=-1),
                    tw1_ref[...], tb1_ref[...], tw2_ref[...], tb2_ref[...], tw3_ref[...])
        y_del = mlp(jnp.concatenate([conv_d, mean2], axis=-1),
                    dw1_ref[...], db1_ref[...], dw2_ref[...], db2_ref[...], dw3_ref[...])

        tau_ref[...] = jnp.exp(y_tau)[:, :, None]         # exp fused (EUP), [bB, 1, 1]
        delta_ref[...] = y_del[:, None, :]                # [bB, 1, L]

    return kernel


# ----------------------------------------------------------------------------
# VMEM-aware batch-tile selection.
# ----------------------------------------------------------------------------
def _round_up(n, m):
    return ((n + m - 1) // m) * m


def _padded_f32_bytes(shape):
    """f32 bytes of an array once padded to (8 sublane, 128 lane) tiles."""
    if len(shape) == 1:
        return 4 * 8 * _round_up(shape[0], 128)
    lead = 1
    for d in shape[:-2]:
        lead *= d
    return 4 * lead * _round_up(shape[-2], 8) * _round_up(shape[-1], 128)


def _vmem_limit_bytes():
    """~96 MiB on v5e/v6e (128 MiB physical), ~48 MiB on v7x (64 MiB per TensorCore)."""
    try:
        cap = int(pltpu.get_tpu_info().vmem_capacity_bytes)
    except Exception:
        cap = 64 * 1024 * 1024            # conservative fallback (safe on every chip)
    return int(max(32 * 1024 * 1024, min(cap * 3 // 4, 100 * 1024 * 1024)))


def _pick_block_b(B, L, E, DL, param_bytes, vmem_limit):
    """Largest batch tile whose padded, double-buffered footprint fits the VMEM budget,
    capped at B//2 so the grid has >= 2 steps (both v7x TCs used; pipeline overlap)."""
    lane_e = _round_up(E, 128)
    lane_l = _round_up(L, 128)
    slab = _round_up(L, 8) * lane_e                     # one padded [L, E] f32 slab (words)
    io_words = (2 * slab                                # x in + out
                + _round_up(DL, 8) * lane_e             # dec
                + 8 * 128                               # tau
                + 8 * lane_l)                           # delta
    per_b_bytes = 4 * (2 * io_words + 6 * slab)         # double-buffered I/O + live temps
    budget = vmem_limit - 2 * param_bytes - (4 << 20)   # resident params (x2 buf) + headroom
    bB = max(1, min(B, budget // per_b_bytes))
    if B >= 2:
        bB = min(bB, max(1, B // 2))
    return int(bB)


# ----------------------------------------------------------------------------
# Wrapper: Model.forward(mode='forward') -> (batch_x, dec_new, tau, delta)
# ----------------------------------------------------------------------------
def dish_forward(batch_x, dec_inp, params, *, label_len, pred_len, block_b=None):
    B, L, E = batch_x.shape
    DL = label_len + pred_len
    f32 = jnp.float32
    x = batch_x.astype(f32)

    tp, dp = params["tau"], params["delta"]
    param_list = (params["ml"], params["gamma"], params["beta"],
                  tp["conv_w"], tp["w1"], tp["b1"], tp["w2"], tp["b2"], tp["w3"],
                  dp["conv_w"], dp["w1"], dp["b1"], dp["w2"], dp["b2"], dp["w3"])

    vmem_limit = _vmem_limit_bytes()
    param_bytes = sum(_padded_f32_bytes(p.shape) for p in param_list)
    bB = block_b if block_b is not None else _pick_block_b(B, L, E, DL, param_bytes, vmem_limit)
    bB = max(1, min(int(bB), B))
    steps = pl.cdiv(B, bB)
    B_pad = steps * bB
    if B_pad != B:                       # non-divisor batch -> pad instead of shrinking bB
        x = jnp.pad(x, ((0, B_pad - B), (0, 0), (0, 0)))

    def batched(*trailing):              # block over the batch dim only
        nd = len(trailing)
        return pl.BlockSpec((bB,) + tuple(trailing), lambda i, _n=nd: (i,) + (0,) * _n)

    def whole(arr):                      # resident parameter (same block every step)
        nd = arr.ndim
        return pl.BlockSpec(arr.shape, lambda i, _n=nd: (0,) * _n)

    out_pad, dec_pad, tau_pad, delta_pad = pl.pallas_call(
        _make_fused_kernel(label_len, pred_len),
        grid=(steps,),
        out_shape=(jax.ShapeDtypeStruct((B_pad, L, E), f32),
                   jax.ShapeDtypeStruct((B_pad, DL, E), f32),
                   jax.ShapeDtypeStruct((B_pad, 1, 1), f32),
                   jax.ShapeDtypeStruct((B_pad, 1, L), f32)),
        in_specs=[batched(L, E)] + [whole(p) for p in param_list],
        out_specs=(batched(L, E), batched(DL, E), batched(1, 1), batched(1, L)),
        compiler_params=pltpu.CompilerParams(
            dimension_semantics=("parallel",),
            vmem_limit_bytes=vmem_limit),
    )(x, *param_list)

    batch_x_out = out_pad[:B]
    dec_new = None if dec_inp is None else dec_pad[:B]
    tau = tau_pad[:B].reshape(B, 1)
    delta = delta_pad[:B].reshape(B, L)
    return batch_x_out, dec_new, tau, delta


# ----------------------------------------------------------------------------
# Deterministic synthetic parameters (mirrors the torch __init__ shapes, stored in
# kernel-friendly layouts; real torch checkpoints would need transposition).
# ----------------------------------------------------------------------------
def init_params(key, *, enc_in, seq_len, hidden_dims, dish_init="standard"):
    E, L = enc_in, seq_len
    k_rm, k_tau, k_delta = jax.random.split(key, 3)

    if dish_init == "standard":
        rm = jax.random.uniform(k_rm, (E, L, 2), jnp.float32) / L
    elif dish_init == "avg":
        rm = jnp.ones((E, L, 2), jnp.float32) / L
    else:  # 'uniform'
        rm = jnp.ones((E, L, 2), jnp.float32) / L \
            + jax.random.uniform(k_rm, (E, L, 2), jnp.float32) / L

    def proj_params(k, out_dim):
        h0, h1 = hidden_dims
        ks = jax.random.split(k, 6)
        return {
            # conv_w[l, k] = torch Conv1d weight[0, l, k]
            "conv_w": jax.random.normal(ks[0], (L, 3), jnp.float32) / jnp.sqrt(3.0 * L),
            # w* stored as [in, out] (torch nn.Linear weight transposed); b* as [1, out]
            "w1": jax.random.normal(ks[1], (2 * E, h0), jnp.float32) / jnp.sqrt(2.0 * E),
            "b1": 0.1 * jax.random.normal(ks[2], (1, h0), jnp.float32),
            "w2": jax.random.normal(ks[3], (h0, h1), jnp.float32) / jnp.sqrt(float(h0)),
            "b2": 0.1 * jax.random.normal(ks[4], (1, h1), jnp.float32),
            "w3": jax.random.normal(ks[5], (h1, out_dim), jnp.float32) / jnp.sqrt(float(h1)),
        }

    return {
        "ml": jnp.transpose(rm[:, :, 0]),            # [L, E]  low column (forward mode)
        "mh": jnp.transpose(rm[:, :, 1]),            # [L, E]  high column (inverse only)
        "gamma": jnp.ones((1, 1, E), jnp.float32),   # per-channel, broadcast over [B, L, E]
        "beta": jnp.zeros((1, 1, E), jnp.float32),
        "tau": proj_params(k_tau, 1),                # tau_learner   (output_dim=1)
        "delta": proj_params(k_delta, L),            # delta_learner (output_dim=seq_len)
    }


# ----------------------------------------------------------------------------
# Pure-JAX reference (same math as the torch module) for a sanity check.
# ----------------------------------------------------------------------------
def _reference(batch_x, params, label_len, pred_len):
    x_raw = batch_x.astype(jnp.float32)
    mean_enc = jnp.mean(x_raw, axis=1, keepdims=True)
    xc = x_raw - mean_enc
    std_enc = jnp.sqrt(jnp.mean(xc * xc, axis=1, keepdims=True) + 1e-5)
    bx = xc / std_enc

    def projector(x, stats, p):
        w = p["conv_w"]                                    # [L, 3]
        xm1 = jnp.roll(x, 1, axis=2)                       # x[..., (e-1)%E]
        xp1 = jnp.roll(x, -1, axis=2)                      # x[..., (e+1)%E]
        conv = (xm1 * w[None, :, 0:1] + x * w[None, :, 1:2]
                + xp1 * w[None, :, 2:3]).sum(axis=1)       # [B, E]
        feat = jnp.concatenate([conv, stats[:, 0, :]], axis=-1)
        hp = jax.lax.Precision.HIGHEST
        h = jax.nn.relu(jnp.dot(feat, p["w1"], precision=hp) + p["b1"])
        h = jax.nn.relu(jnp.dot(h, p["w2"], precision=hp) + p["b2"])
        return jnp.dot(h, p["w3"], precision=hp)

    tau = jnp.exp(projector(x_raw, std_enc, params["tau"]))
    delta = projector(x_raw, mean_enc, params["delta"])

    theta_l = jnp.einsum('ble,le->be', bx, params["ml"])[:, None, :]
    phil = jax.nn.gelu(theta_l, approximate=False)
    xil = jnp.sum((bx - phil) ** 2, axis=1, keepdims=True) / (bx.shape[1] - 1)
    gamma, beta = params["gamma"], params["beta"]

    def fwd_proc(v):
        return (v - phil) / jnp.sqrt(xil + 1e-8) * gamma + beta

    out = fwd_proc(bx)
    dec = jnp.concatenate(
        [bx[:, :label_len, :],
         jnp.zeros((bx.shape[0], pred_len, bx.shape[2]), bx.dtype)], axis=1)
    return out, fwd_proc(dec), tau, delta


if __name__ == "__main__":
    # small config consistent with the module: c_out == enc_in == 4, seq_len == 8
    B, L, E = 2, 8, 4
    label_len, pred_len = 4, 4
    hidden_dims = (16, 16)   # p_hidden_dims, p_hidden_layers = 2

    key = jax.random.PRNGKey(0)
    kx, kd, kp = jax.random.split(key, 3)
    batch_x = jax.random.normal(kx, (B, L, E), jnp.float32)
    dec_inp = jax.random.normal(kd, (B, label_len + pred_len, E), jnp.float32)
    params = init_params(kp, enc_in=E, seq_len=L, hidden_dims=hidden_dims)

    fwd = jax.jit(functools.partial(dish_forward, label_len=label_len, pred_len=pred_len))
    batch_x_out, dec_new, tau, delta = fwd(batch_x, dec_inp, params)
    jax.block_until_ready((batch_x_out, dec_new, tau, delta))

    assert batch_x_out.shape == (B, L, E)
    assert dec_new.shape == (B, label_len + pred_len, E)
    assert tau.shape == (B, 1)
    assert delta.shape == (B, L)

    # loose-tolerance reference check (erf-GELU approximation + matmul precision)
    r_out, r_dec, r_tau, r_delta = _reference(batch_x, params, label_len, pred_len)
    assert bool(jnp.allclose(batch_x_out, r_out, rtol=2e-2, atol=2e-2))
    assert bool(jnp.allclose(dec_new, r_dec, rtol=2e-2, atol=2e-2))
    assert bool(jnp.allclose(tau, r_tau.reshape(B, 1), rtol=2e-2, atol=2e-2))
    assert bool(jnp.allclose(delta, r_delta.reshape(B, L), rtol=2e-2, atol=2e-2))

    print("KERNEL_OK")
</pallas_src>

<mosaic_0001>
module attributes {stable_mosaic.version = 11 : i64} {
  func.func @kernel(%arg0: i32, %arg1: memref<1x8x4xf32, #tpu.memory_space<vmem>>, %arg2: memref<8x4xf32, #tpu.memory_space<vmem>>, %arg3: memref<1x1x4xf32, #tpu.memory_space<vmem>>, %arg4: memref<1x1x4xf32, #tpu.memory_space<vmem>>, %arg5: memref<8x3xf32, #tpu.memory_space<vmem>>, %arg6: memref<8x16xf32, #tpu.memory_space<vmem>>, %arg7: memref<1x16xf32, #tpu.memory_space<vmem>>, %arg8: memref<16x16xf32, #tpu.memory_space<vmem>>, %arg9: memref<1x16xf32, #tpu.memory_space<vmem>>, %arg10: memref<16x1xf32, #tpu.memory_space<vmem>>, %arg11: memref<8x3xf32, #tpu.memory_space<vmem>>, %arg12: memref<8x16xf32, #tpu.memory_space<vmem>>, %arg13: memref<1x16xf32, #tpu.memory_space<vmem>>, %arg14: memref<16x16xf32, #tpu.memory_space<vmem>>, %arg15: memref<1x16xf32, #tpu.memory_space<vmem>>, %arg16: memref<16x8xf32, #tpu.memory_space<vmem>>, %arg17: memref<1x8x4xf32, #tpu.memory_space<vmem>>, %arg18: memref<1x8x4xf32, #tpu.memory_space<vmem>>, %arg19: memref<1x1x1xf32, #tpu.memory_space<vmem>>, %arg20: memref<1x1x8xf32, #tpu.memory_space<vmem>>) attributes {dimension_semantics = [#tpu.dimension_semantics<parallel>], iteration_bounds = array<i64: 2>, scalar_prefetch = 0 : i64, scratch_operands = 0 : i64, tpu.core_type = #tpu.core_type<tc>, window_params = [{transform_indices = @transform_0, window_bounds = array<i64: 1, 8, 4>}, {pipeline_mode = #tpu.pipeline_mode<synchronous>, transform_indices = @transform_1, window_bounds = array<i64: 8, 4>}, {pipeline_mode = #tpu.pipeline_mode<synchronous>, transform_indices = @transform_2, window_bounds = array<i64: 1, 1, 4>}, {pipeline_mode = #tpu.pipeline_mode<synchronous>, transform_indices = @transform_3, window_bounds = array<i64: 1, 1, 4>}, {pipeline_mode = #tpu.pipeline_mode<synchronous>, transform_indices = @transform_4, window_bounds = array<i64: 8, 3>}, {pipeline_mode = #tpu.pipeline_mode<synchronous>, transform_indices = @transform_5, window_bounds = array<i64: 8, 16>}, {pipeline_mode = #tpu.pipeline_mode<synchronous>, transform_indices = @transform_6, window_bounds = array<i64: 1, 16>}, {pipeline_mode = #tpu.pipeline_mode<synchronous>, transform_indices = @transform_7, window_bounds = array<i64: 16, 16>}, {pipeline_mode = #tpu.pipeline_mode<synchronous>, transform_indices = @transform_8, window_bounds = array<i64: 1, 16>}, {pipeline_mode = #tpu.pipeline_mode<synchronous>, transform_indices = @transform_9, window_bounds = array<i64: 16, 1>}, {pipeline_mode = #tpu.pipeline_mode<synchronous>, transform_indices = @transform_10, window_bounds = array<i64: 8, 3>}, {pipeline_mode = #tpu.pipeline_mode<synchronous>, transform_indices = @transform_11, window_bounds = array<i64: 8, 16>}, {pipeline_mode = #tpu.pipeline_mode<synchronous>, transform_indices = @transform_12, window_bounds = array<i64: 1, 16>}, {pipeline_mode = #tpu.pipeline_mode<synchronous>, transform_indices = @transform_13, window_bounds = array<i64: 16, 16>}, {pipeline_mode = #tpu.pipeline_mode<synchronous>, transform_indices = @transform_14, window_bounds = array<i64: 1, 16>}, {pipeline_mode = #tpu.pipeline_mode<synchronous>, transform_indices = @transform_15, window_bounds = array<i64: 16, 8>}, {transform_indices = @transform_16, window_bounds = array<i64: 1, 8, 4>}, {transform_indices = @transform_17, window_bounds = array<i64: 1, 8, 4>}, {transform_indices = @transform_18, window_bounds = array<i64: 1, 1, 1>}, {transform_indices = @transform_19, window_bounds = array<i64: 1, 1, 8>}]} {
    %c0 = arith.constant 0 : index
    %c0_0 = arith.constant 0 : index
    %c0_1 = arith.constant 0 : index
    %0 = vector.load %arg1[%c0, %c0_0, %c0_1] : memref<1x8x4xf32, #tpu.memory_space<vmem>>, vector<1x8x4xf32>
    %cst = arith.constant dense<0.000000e+00> : vector<1x4xf32>
    %1 = vector.multi_reduction <add>, %0, %cst [1] : vector<1x8x4xf32> to vector<1x4xf32>
    %2 = vector.shape_cast %1 : vector<1x4xf32> to vector<1x1x4xf32>
    %cst_2 = arith.constant 8.000000e+00 : f32
    %3 = vector.broadcast %cst_2 : f32 to vector<1x1x4xf32>
    %4 = arith.divf %2, %3 : vector<1x1x4xf32>
    %5 = vector.broadcast %4 : vector<1x1x4xf32> to vector<1x8x4xf32>
    %6 = arith.subf %0, %5 : vector<1x8x4xf32>
    %7 = arith.mulf %6, %6 : vector<1x8x4xf32>
    %cst_3 = arith.constant dense<0.000000e+00> : vector<1x4xf32>
    %8 = vector.multi_reduction <add>, %7, %cst_3 [1] : vector<1x8x4xf32> to vector<1x4xf32>
    %9 = vector.shape_cast %8 : vector<1x4xf32> to vector<1x1x4xf32>
    %cst_4 = arith.constant 8.000000e+00 : f32
    %10 = vector.broadcast %cst_4 : f32 to vector<1x1x4xf32>
    %11 = arith.divf %9, %10 : vector<1x1x4xf32>
    %cst_5 = arith.constant 9.99999974E-6 : f32
    %12 = vector.broadcast %cst_5 : f32 to vector<1x1x4xf32>
    %13 = arith.addf %11, %12 : vector<1x1x4xf32>
    %14 = math.rsqrt %13 : vector<1x1x4xf32>
    %15 = vector.broadcast %14 : vector<1x1x4xf32> to vector<1x8x4xf32>
    %16 = arith.mulf %6, %15 : vector<1x8x4xf32>
    %c0_6 = arith.constant 0 : index
    %c0_7 = arith.constant 0 : index
    %17 = vector.load %arg2[%c0_6, %c0_7] : memref<8x4xf32, #tpu.memory_space<vmem>>, vector<8x4xf32>
    %18 = vector.shape_cast %17 : vector<8x4xf32> to vector<1x8x4xf32>
    %19 = arith.mulf %16, %18 : vector<1x8x4xf32>
    %cst_8 = arith.constant dense<0.000000e+00> : vector<1x4xf32>
    %20 = vector.multi_reduction <add>, %19, %cst_8 [1] : vector<1x8x4xf32> to vector<1x4xf32>
    %21 = vector.shape_cast %20 : vector<1x4xf32> to vector<1x1x4xf32>
    %cst_9 = arith.constant 5.000000e-01 : f32
    %22 = vector.broadcast %cst_9 : f32 to vector<1x1x4xf32>
    %23 = arith.mulf %22, %21 : vector<1x1x4xf32>
    %cst_10 = arith.constant 0.707106769 : f32
    %24 = vector.broadcast %cst_10 : f32 to vector<1x1x4xf32>
    %25 = arith.mulf %21, %24 : vector<1x1x4xf32>
    %26 = math.absf %25 : vector<1x1x4xf32>
    %cst_11 = arith.constant 0.327591091 : f32
    %27 = vector.broadcast %cst_11 : f32 to vector<1x1x4xf32>
    %28 = arith.mulf %27, %26 : vector<1x1x4xf32>
    %cst_12 = arith.constant 1.000000e+00 : f32
    %29 = vector.broadcast %cst_12 : f32 to vector<1x1x4xf32>
    %30 = arith.addf %29, %28 : vector<1x1x4xf32>
    %cst_13 = arith.constant 1.000000e+00 : f32
    %31 = vector.broadcast %cst_13 : f32 to vector<1x1x4xf32>
    %32 = arith.divf %31, %30 : vector<1x1x4xf32>
    %cst_14 = arith.constant 1.06140542 : f32
    %33 = vector.broadcast %cst_14 : f32 to vector<1x1x4xf32>
    %34 = arith.mulf %32, %33 : vector<1x1x4xf32>
    %cst_15 = arith.constant -1.45315206 : f32
    %35 = vector.broadcast %cst_15 : f32 to vector<1x1x4xf32>
    %36 = arith.addf %35, %34 : vector<1x1x4xf32>
    %37 = arith.mulf %32, %36 : vector<1x1x4xf32>
    %cst_16 = arith.constant 1.42141378 : f32
    %38 = vector.broadcast %cst_16 : f32 to vector<1x1x4xf32>
    %39 = arith.addf %38, %37 : vector<1x1x4xf32>
    %40 = arith.mulf %32, %39 : vector<1x1x4xf32>
    %cst_17 = arith.constant -0.284496725 : f32
    %41 = vector.broadcast %cst_17 : f32 to vector<1x1x4xf32>
    %42 = arith.addf %41, %40 : vector<1x1x4xf32>
    %43 = arith.mulf %32, %42 : vector<1x1x4xf32>
    %cst_18 = arith.constant 0.254829586 : f32
    %44 = vector.broadcast %cst_18 : f32 to vector<1x1x4xf32>
    %45 = arith.addf %44, %43 : vector<1x1x4xf32>
    %46 = arith.mulf %32, %45 : vector<1x1x4xf32>
    %47 = arith.mulf %26, %26 : vector<1x1x4xf32>
    %cst_19 = arith.constant 0.000000e+00 : f32
    %48 = vector.broadcast %cst_19 : f32 to vector<1x1x4xf32>
    %49 = arith.subf %48, %47 : vector<1x1x4xf32>
    %50 = math.exp %49 : vector<1x1x4xf32>
    %51 = arith.mulf %46, %50 : vector<1x1x4xf32>
    %cst_20 = arith.constant 1.000000e+00 : f32
    %52 = vector.broadcast %cst_20 : f32 to vector<1x1x4xf32>
    %53 = arith.subf %52, %51 : vector<1x1x4xf32>
    %cst_21 = arith.constant 0.000000e+00 : f32
    %54 = vector.broadcast %cst_21 : f32 to vector<1x1x4xf32>
    %55 = arith.cmpf oge, %25, %54 : vector<1x1x4xf32>
    %cst_22 = arith.constant 0.000000e+00 : f32
    %56 = vector.broadcast %cst_22 : f32 to vector<1x1x4xf32>
    %57 = arith.subf %56, %53 : vector<1x1x4xf32>
    %58 = arith.select %55, %53, %57 : vector<1x1x4xi1>, vector<1x1x4xf32>
    %cst_23 = arith.constant 1.000000e+00 : f32
    %59 = vector.broadcast %cst_23 : f32 to vector<1x1x4xf32>
    %60 = arith.addf %59, %58 : vector<1x1x4xf32>
    %61 = arith.mulf %23, %60 : vector<1x1x4xf32>
    %62 = vector.broadcast %61 : vector<1x1x4xf32> to vector<1x8x4xf32>
    %63 = arith.subf %16, %62 : vector<1x8x4xf32>
    %64 = arith.mulf %63, %63 : vector<1x8x4xf32>
    %cst_24 = arith.constant dense<0.000000e+00> : vector<1x4xf32>
    %65 = vector.multi_reduction <add>, %64, %cst_24 [1] : vector<1x8x4xf32> to vector<1x4xf32>
    %66 = vector.shape_cast %65 : vector<1x4xf32> to vector<1x1x4xf32>
    %cst_25 = arith.constant 0.142857149 : f32
    %67 = vector.broadcast %cst_25 : f32 to vector<1x1x4xf32>
    %68 = arith.mulf %66, %67 : vector<1x1x4xf32>
    %c0_26 = arith.constant 0 : index
    %c0_27 = arith.constant 0 : index
    %c0_28 = arith.constant 0 : index
    %69 = vector.load %arg3[%c0_26, %c0_27, %c0_28] : memref<1x1x4xf32, #tpu.memory_space<vmem>>, vector<1x1x4xf32>
    %cst_29 = arith.constant 9.99999993E-9 : f32
    %70 = vector.broadcast %cst_29 : f32 to vector<1x1x4xf32>
    %71 = arith.addf %68, %70 : vector<1x1x4xf32>
    %72 = math.rsqrt %71 : vector<1x1x4xf32>
    %73 = arith.mulf %69, %72 : vector<1x1x4xf32>
    %c0_30 = arith.constant 0 : index
    %c0_31 = arith.constant 0 : index
    %c0_32 = arith.constant 0 : index
    %74 = vector.load %arg4[%c0_30, %c0_31, %c0_32] : memref<1x1x4xf32, #tpu.memory_space<vmem>>, vector<1x1x4xf32>
    %75 = vector.broadcast %73 : vector<1x1x4xf32> to vector<1x8x4xf32>
    %76 = arith.mulf %63, %75 : vector<1x8x4xf32>
    %77 = vector.broadcast %74 : vector<1x1x4xf32> to vector<1x8x4xf32>
    %78 = arith.addf %76, %77 : vector<1x8x4xf32>
    %c0_33 = arith.constant 0 : index
    %c0_34 = arith.constant 0 : index
    %c0_35 = arith.constant 0 : index
    %79 = vector.load %arg17[%c0_33, %c0_34, %c0_35] : memref<1x8x4xf32, #tpu.memory_space<vmem>>, vector<1x8x4xf32>
    tpu.vector_store %arg17[%c0_33, %c0_34, %c0_35], %78 {strides = array<i32>} : memref<1x8x4xf32, #tpu.memory_space<vmem>>, vector<1x8x4xf32>,
    %80 = arith.mulf %61, %73 : vector<1x1x4xf32>
    %81 = arith.subf %74, %80 : vector<1x1x4xf32>
    %82 = vector.extract_strided_slice %78 {offsets = [0, 0, 0], sizes = [1, 4, 4], strides = [1, 1, 1]} : vector<1x8x4xf32> to vector<1x4x4xf32>
    %c0_36 = arith.constant 0 : index
    %c0_37 = arith.constant 0 : index
    %c0_38 = arith.constant 0 : index
    %83 = vector.load %arg18[%c0_36, %c0_37, %c0_38] : memref<1x8x4xf32, #tpu.memory_space<vmem>>, vector<1x4x4xf32>
    tpu.vector_store %arg18[%c0_36, %c0_37, %c0_38], %82 {strides = array<i32>} : memref<1x8x4xf32, #tpu.memory_space<vmem>>, vector<1x4x4xf32>,
    %84 = vector.shape_cast %81 : vector<1x1x4xf32> to vector<1x1x4xf32>
    %85 = vector.broadcast %84 : vector<1x1x4xf32> to vector<1x4x4xf32>
    %c0_39 = arith.constant 0 : index
    %c4 = arith.constant 4 : index
    %c0_40 = arith.constant 0 : index
    %86 = vector.load %arg18[%c0_39, %c4, %c0_40] : memref<1x8x4xf32, #tpu.memory_space<vmem>>, vector<1x4x4xf32>
    tpu.vector_store %arg18[%c0_39, %c4, %c0_40], %85 {strides = array<i32>} : memref<1x8x4xf32, #tpu.memory_space<vmem>>, vector<1x4x4xf32>,
    %c0_41 = arith.constant 0 : index
    %c0_42 = arith.constant 0 : index
    %87 = vector.load %arg5[%c0_41, %c0_42] : memref<8x3xf32, #tpu.memory_space<vmem>>, vector<8x3xf32>
    %c0_43 = arith.constant 0 : index
    %c0_44 = arith.constant 0 : index
    %88 = vector.load %arg11[%c0_43, %c0_44] : memref<8x3xf32, #tpu.memory_space<vmem>>, vector<8x3xf32>
    %89 = vector.extract_strided_slice %87 {offsets = [0, 0], sizes = [8, 1], strides = [1, 1]} : vector<8x3xf32> to vector<8x1xf32>
    %90 = vector.shape_cast %89 : vector<8x1xf32> to vector<1x8x1xf32>
    %91 = vector.broadcast %90 : vector<1x8x1xf32> to vector<1x8x4xf32>
    %92 = arith.mulf %0, %91 : vector<1x8x4xf32>
    %cst_45 = arith.constant dense<0.000000e+00> : vector<1x4xf32>
    %93 = vector.multi_reduction <add>, %92, %cst_45 [1] : vector<1x8x4xf32> to vector<1x4xf32>
    %94 = vector.extract_strided_slice %93 {offsets = [0, 3], sizes = [1, 1], strides = [1, 1]} : vector<1x4xf32> to vector<1x1xf32>
    %95 = vector.extract_strided_slice %93 {offsets = [0, 0], sizes = [1, 3], strides = [1, 1]} : vector<1x4xf32> to vector<1x3xf32>
    %96 = tpu.concatenate %94, %95 in 1 : vector<1x1xf32>, vector<1x3xf32> -> vector<1x4xf32>
    %97 = vector.extract_strided_slice %87 {offsets = [0, 1], sizes = [8, 1], strides = [1, 1]} : vector<8x3xf32> to vector<8x1xf32>
    %98 = vector.shape_cast %97 : vector<8x1xf32> to vector<1x8x1xf32>
    %99 = vector.broadcast %98 : vector<1x8x1xf32> to vector<1x8x4xf32>
    %100 = arith.mulf %0, %99 : vector<1x8x4xf32>
    %cst_46 = arith.constant dense<0.000000e+00> : vector<1x4xf32>
    %101 = vector.multi_reduction <add>, %100, %cst_46 [1] : vector<1x8x4xf32> to vector<1x4xf32>
    %102 = arith.addf %96, %101 : vector<1x4xf32>
    %103 = vector.extract_strided_slice %87 {offsets = [0, 2], sizes = [8, 1], strides = [1, 1]} : vector<8x3xf32> to vector<8x1xf32>
    %104 = vector.shape_cast %103 : vector<8x1xf32> to vector<1x8x1xf32>
    %105 = vector.broadcast %104 : vector<1x8x1xf32> to vector<1x8x4xf32>
    %106 = arith.mulf %0, %105 : vector<1x8x4xf32>
    %cst_47 = arith.constant dense<0.000000e+00> : vector<1x4xf32>
    %107 = vector.multi_reduction <add>, %106, %cst_47 [1] : vector<1x8x4xf32> to vector<1x4xf32>
    %108 = vector.extract_strided_slice %107 {offsets = [0, 1], sizes = [1, 3], strides = [1, 1]} : vector<1x4xf32> to vector<1x3xf32>
    %109 = vector.extract_strided_slice %107 {offsets = [0, 0], sizes = [1, 1], strides = [1, 1]} : vector<1x4xf32> to vector<1x1xf32>
    %110 = tpu.concatenate %108, %109 in 1 : vector<1x3xf32>, vector<1x1xf32> -> vector<1x4xf32>
    %111 = arith.addf %102, %110 : vector<1x4xf32>
    %112 = vector.extract_strided_slice %88 {offsets = [0, 0], sizes = [8, 1], strides = [1, 1]} : vector<8x3xf32> to vector<8x1xf32>
    %113 = vector.shape_cast %112 : vector<8x1xf32> to vector<1x8x1xf32>
    %114 = vector.broadcast %113 : vector<1x8x1xf32> to vector<1x8x4xf32>
    %115 = arith.mulf %0, %114 : vector<1x8x4xf32>
    %cst_48 = arith.constant dense<0.000000e+00> : vector<1x4xf32>
    %116 = vector.multi_reduction <add>, %115, %cst_48 [1] : vector<1x8x4xf32> to vector<1x4xf32>
    %117 = vector.extract_strided_slice %116 {offsets = [0, 3], sizes = [1, 1], strides = [1, 1]} : vector<1x4xf32> to vector<1x1xf32>
    %118 = vector.extract_strided_slice %116 {offsets = [0, 0], sizes = [1, 3], strides = [1, 1]} : vector<1x4xf32> to vector<1x3xf32>
    %119 = tpu.concatenate %117, %118 in 1 : vector<1x1xf32>, vector<1x3xf32> -> vector<1x4xf32>
    %120 = vector.extract_strided_slice %88 {offsets = [0, 1], sizes = [8, 1], strides = [1, 1]} : vector<8x3xf32> to vector<8x1xf32>
    %121 = vector.shape_cast %120 : vector<8x1xf32> to vector<1x8x1xf32>
    %122 = vector.broadcast %121 : vector<1x8x1xf32> to vector<1x8x4xf32>
    %123 = arith.mulf %0, %122 : vector<1x8x4xf32>
    %cst_49 = arith.constant dense<0.000000e+00> : vector<1x4xf32>
    %124 = vector.multi_reduction <add>, %123, %cst_49 [1] : vector<1x8x4xf32> to vector<1x4xf32>
    %125 = arith.addf %119, %124 : vector<1x4xf32>
    %126 = vector.extract_strided_slice %88 {offsets = [0, 2], sizes = [8, 1], strides = [1, 1]} : vector<8x3xf32> to vector<8x1xf32>
    %127 = vector.shape_cast %126 : vector<8x1xf32> to vector<1x8x1xf32>
    %128 = vector.broadcast %127 : vector<1x8x1xf32> to vector<1x8x4xf32>
    %129 = arith.mulf %0, %128 : vector<1x8x4xf32>
    %cst_50 = arith.constant dense<0.000000e+00> : vector<1x4xf32>
    %130 = vector.multi_reduction <add>, %129, %cst_50 [1] : vector<1x8x4xf32> to vector<1x4xf32>
    %131 = vector.extract_strided_slice %130 {offsets = [0, 1], sizes = [1, 3], strides = [1, 1]} : vector<1x4xf32> to vector<1x3xf32>
    %132 = vector.extract_strided_slice %130 {offsets = [0, 0], sizes = [1, 1], strides = [1, 1]} : vector<1x4xf32> to vector<1x1xf32>
    %133 = tpu.concatenate %131, %132 in 1 : vector<1x3xf32>, vector<1x1xf32> -> vector<1x4xf32>
    %134 = arith.addf %125, %133 : vector<1x4xf32>
    %135 = vector.shape_cast %11 : vector<1x1x4xf32> to vector<1x4xf32>
    %cst_51 = arith.constant 9.99999974E-6 : f32
    %136 = vector.broadcast %cst_51 : f32 to vector<1x4xf32>
    %137 = arith.addf %135, %136 : vector<1x4xf32>
    %138 = math.sqrt %137 : vector<1x4xf32>
    %139 = vector.shape_cast %4 : vector<1x1x4xf32> to vector<1x4xf32>
    %140 = tpu.concatenate %111, %138 in 1 : vector<1x4xf32>, vector<1x4xf32> -> vector<1x8xf32>
    %c0_52 = arith.constant 0 : index
    %c0_53 = arith.constant 0 : index
    %141 = vector.load %arg6[%c0_52, %c0_53] : memref<8x16xf32, #tpu.memory_space<vmem>>, vector<8x16xf32>
    %c0_54 = arith.constant 0 : index
    %c0_55 = arith.constant 0 : index
    %142 = vector.load %arg7[%c0_54, %c0_55] : memref<1x16xf32, #tpu.memory_space<vmem>>, vector<1x16xf32>
    %c0_56 = arith.constant 0 : index
    %c0_57 = arith.constant 0 : index
    %143 = vector.load %arg8[%c0_56, %c0_57] : memref<16x16xf32, #tpu.memory_space<vmem>>, vector<16x16xf32>
    %c0_58 = arith.constant 0 : index
    %c0_59 = arith.constant 0 : index
    %144 = vector.load %arg9[%c0_58, %c0_59] : memref<1x16xf32, #tpu.memory_space<vmem>>, vector<1x16xf32>
    %c0_60 = arith.constant 0 : index
    %c0_61 = arith.constant 0 : index
    %145 = vector.load %arg10[%c0_60, %c0_61] : memref<16x1xf32, #tpu.memory_space<vmem>>, vector<16x1xf32>
    %cst_62 = arith.constant dense<0.000000e+00> : vector<1x16xf32>
    %146 = tpu.matmul %140, %141, %cst_62 {dimension_numbers = #tpu.dot_dimension_numbers<[1], [0], [0], [1], [0, 0, 1, 1], [], []>} : vector<1x8xf32>, vector<8x16xf32>, vector<1x16xf32> -> vector<1x16xf32>
    %147 = arith.addf %146, %142 : vector<1x16xf32>
    %cst_63 = arith.constant 0.000000e+00 : f32
    %148 = vector.broadcast %cst_63 : f32 to vector<1x16xf32>
    %149 = arith.maximumf %147, %148 : vector<1x16xf32>
    %cst_64 = arith.constant dense<0.000000e+00> : vector<1x16xf32>
    %150 = tpu.matmul %149, %143, %cst_64 {dimension_numbers = #tpu.dot_dimension_numbers<[1], [0], [0], [1], [0, 0, 1, 1], [], []>} : vector<1x16xf32>, vector<16x16xf32>, vector<1x16xf32> -> vector<1x16xf32>
    %151 = arith.addf %150, %144 : vector<1x16xf32>
    %cst_65 = arith.constant 0.000000e+00 : f32
    %152 = vector.broadcast %cst_65 : f32 to vector<1x16xf32>
    %153 = arith.maximumf %151, %152 : vector<1x16xf32>
    %cst_66 = arith.constant dense<0.000000e+00> : vector<1x1xf32>
    %154 = tpu.matmul %153, %145, %cst_66 {dimension_numbers = #tpu.dot_dimension_numbers<[1], [0], [0], [1], [0, 0, 1, 1], [], []>} : vector<1x16xf32>, vector<16x1xf32>, vector<1x1xf32> -> vector<1x1xf32>
    %155 = tpu.concatenate %134, %139 in 1 : vector<1x4xf32>, vector<1x4xf32> -> vector<1x8xf32>
    %c0_67 = arith.constant 0 : index
    %c0_68 = arith.constant 0 : index
    %156 = vector.load %arg12[%c0_67, %c0_68] : memref<8x16xf32, #tpu.memory_space<vmem>>, vector<8x16xf32>
    %c0_69 = arith.constant 0 : index
    %c0_70 = arith.constant 0 : index
    %157 = vector.load %arg13[%c0_69, %c0_70] : memref<1x16xf32, #tpu.memory_space<vmem>>, vector<1x16xf32>
    %c0_71 = arith.constant 0 : index
    %c0_72 = arith.constant 0 : index
    %158 = vector.load %arg14[%c0_71, %c0_72] : memref<16x16xf32, #tpu.memory_space<vmem>>, vector<16x16xf32>
    %c0_73 = arith.constant 0 : index
    %c0_74 = arith.constant 0 : index
    %159 = vector.load %arg15[%c0_73, %c0_74] : memref<1x16xf32, #tpu.memory_space<vmem>>, vector<1x16xf32>
    %c0_75 = arith.constant 0 : index
    %c0_76 = arith.constant 0 : index
    %160 = vector.load %arg16[%c0_75, %c0_76] : memref<16x8xf32, #tpu.memory_space<vmem>>, vector<16x8xf32>
    %cst_77 = arith.constant dense<0.000000e+00> : vector<1x16xf32>
    %161 = tpu.matmul %155, %156, %cst_77 {dimension_numbers = #tpu.dot_dimension_numbers<[1], [0], [0], [1], [0, 0, 1, 1], [], []>} : vector<1x8xf32>, vector<8x16xf32>, vector<1x16xf32> -> vector<1x16xf32>
    %162 = arith.addf %161, %157 : vector<1x16xf32>
    %cst_78 = arith.constant 0.000000e+00 : f32
    %163 = vector.broadcast %cst_78 : f32 to vector<1x16xf32>
    %164 = arith.maximumf %162, %163 : vector<1x16xf32>
    %cst_79 = arith.constant dense<0.000000e+00> : vector<1x16xf32>
    %165 = tpu.matmul %164, %158, %cst_79 {dimension_numbers = #tpu.dot_dimension_numbers<[1], [0], [0], [1], [0, 0, 1, 1], [], []>} : vector<1x16xf32>, vector<16x16xf32>, vector<1x16xf32> -> vector<1x16xf32>
    %166 = arith.addf %165, %159 : vector<1x16xf32>
    %cst_80 = arith.constant 0.000000e+00 : f32
    %167 = vector.broadcast %cst_80 : f32 to vector<1x16xf32>
    %168 = arith.maximumf %166, %167 : vector<1x16xf32>
    %cst_81 = arith.constant dense<0.000000e+00> : vector<1x8xf32>
    %169 = tpu.matmul %168, %160, %cst_81 {dimension_numbers = #tpu.dot_dimension_numbers<[1], [0], [0], [1], [0, 0, 1, 1], [], []>} : vector<1x16xf32>, vector<16x8xf32>, vector<1x8xf32> -> vector<1x8xf32>
    %170 = math.exp %154 : vector<1x1xf32>
    %171 = vector.shape_cast %170 : vector<1x1xf32> to vector<1x1x1xf32>
    %c0_82 = arith.constant 0 : index
    %c0_83 = arith.constant 0 : index
    %c0_84 = arith.constant 0 : index
    %172 = vector.load %arg19[%c0_82, %c0_83, %c0_84] : memref<1x1x1xf32, #tpu.memory_space<vmem>>, vector<1x1x1xf32>
    tpu.vector_store %arg19[%c0_82, %c0_83, %c0_84], %171 {strides = array<i32>} : memref<1x1x1xf32, #tpu.memory_space<vmem>>, vector<1x1x1xf32>,
    %173 = vector.shape_cast %169 : vector<1x8xf32> to vector<1x1x8xf32>
    %c0_85 = arith.constant 0 : index
    %c0_86 = arith.constant 0 : index
    %c0_87 = arith.constant 0 : index
    %174 = vector.load %arg20[%c0_85, %c0_86, %c0_87] : memref<1x1x8xf32, #tpu.memory_space<vmem>>, vector<1x1x8xf32>
    tpu.vector_store %arg20[%c0_85, %c0_86, %c0_87], %173 {strides = array<i32>} : memref<1x1x8xf32, #tpu.memory_space<vmem>>, vector<1x1x8xf32>,
    return
  }
  func.func @transform_0(%arg0: i32) -> (i32, i32, i32) {
    %c0_i32 = arith.constant 0 : i32
    %c0_i32_0 = arith.constant 0 : i32
    %c0_i32_1 = arith.constant 0 : i32
    return %arg0, %c0_i32, %c0_i32_0 : i32, i32, i32
  }
  func.func @transform_1(%arg0: i32) -> (i32, i32) {
    %c0_i32 = arith.constant 0 : i32
    %c0_i32_0 = arith.constant 0 : i32
    %c0_i32_1 = arith.constant 0 : i32
    return %c0_i32, %c0_i32_0 : i32, i32
  }
  func.func @transform_2(%arg0: i32) -> (i32, i32, i32) {
    %c0_i32 = arith.constant 0 : i32
    %c0_i32_0 = arith.constant 0 : i32
    %c0_i32_1 = arith.constant 0 : i32
    %c0_i32_2 = arith.constant 0 : i32
    return %c0_i32, %c0_i32_0, %c0_i32_1 : i32, i32, i32
  }
  func.func @transform_3(%arg0: i32) -> (i32, i32, i32) {
    %c0_i32 = arith.constant 0 : i32
    %c0_i32_0 = arith.constant 0 : i32
    %c0_i32_1 = arith.constant 0 : i32
    %c0_i32_2 = arith.constant 0 : i32
    return %c0_i32, %c0_i32_0, %c0_i32_1 : i32, i32, i32
  }
  func.func @transform_4(%arg0: i32) -> (i32, i32) {
    %c0_i32 = arith.constant 0 : i32
    %c0_i32_0 = arith.constant 0 : i32
    %c0_i32_1 = arith.constant 0 : i32
    return %c0_i32, %c0_i32_0 : i32, i32
  }
  func.func @transform_5(%arg0: i32) -> (i32, i32) {
    %c0_i32 = arith.constant 0 : i32
    %c0_i32_0 = arith.constant 0 : i32
    %c0_i32_1 = arith.constant 0 : i32
    return %c0_i32, %c0_i32_0 : i32, i32
  }
  func.func @transform_6(%arg0: i32) -> (i32, i32) {
    %c0_i32 = arith.constant 0 : i32
    %c0_i32_0 = arith.constant 0 : i32
    %c0_i32_1 = arith.constant 0 : i32
    return %c0_i32, %c0_i32_0 : i32, i32
  }
  func.func @transform_7(%arg0: i32) -> (i32, i32) {
    %c0_i32 = arith.constant 0 : i32
    %c0_i32_0 = arith.constant 0 : i32
    %c0_i32_1 = arith.constant 0 : i32
    return %c0_i32, %c0_i32_0 : i32, i32
  }
  func.func @transform_8(%arg0: i32) -> (i32, i32) {
    %c0_i32 = arith.constant 0 : i32
    %c0_i32_0 = arith.constant 0 : i32
    %c0_i32_1 = arith.constant 0 : i32
    return %c0_i32, %c0_i32_0 : i32, i32
  }
  func.func @transform_9(%arg0: i32) -> (i32, i32) {
    %c0_i32 = arith.constant 0 : i32
    %c0_i32_0 = arith.constant 0 : i32
    %c0_i32_1 = arith.constant 0 : i32
    return %c0_i32, %c0_i32_0 : i32, i32
  }
  func.func @transform_10(%arg0: i32) -> (i32, i32) {
    %c0_i32 = arith.constant 0 : i32
    %c0_i32_0 = arith.constant 0 : i32
    %c0_i32_1 = arith.constant 0 : i32
    return %c0_i32, %c0_i32_0 : i32, i32
  }
  func.func @transform_11(%arg0: i32) -> (i32, i32) {
    %c0_i32 = arith.constant 0 : i32
    %c0_i32_0 = arith.constant 0 : i32
    %c0_i32_1 = arith.constant 0 : i32
    return %c0_i32, %c0_i32_0 : i32, i32
  }
  func.func @transform_12(%arg0: i32) -> (i32, i32) {
    %c0_i32 = arith.constant 0 : i32
    %c0_i32_0 = arith.constant 0 : i32
    %c0_i32_1 = arith.constant 0 : i32
    return %c0_i32, %c0_i32_0 : i32, i32
  }
  func.func @transform_13(%arg0: i32) -> (i32, i32) {
    %c0_i32 = arith.constant 0 : i32
    %c0_i32_0 = arith.constant 0 : i32
    %c0_i32_1 = arith.constant 0 : i32
    return %c0_i32, %c0_i32_0 : i32, i32
  }
  func.func @transform_14(%arg0: i32) -> (i32, i32) {
    %c0_i32 = arith.constant 0 : i32
    %c0_i32_0 = arith.constant 0 : i32
    %c0_i32_1 = arith.constant 0 : i32
    return %c0_i32, %c0_i32_0 : i32, i32
  }
  func.func @transform_15(%arg0: i32) -> (i32, i32) {
    %c0_i32 = arith.constant 0 : i32
    %c0_i32_0 = arith.constant 0 : i32
    %c0_i32_1 = arith.constant 0 : i32
    return %c0_i32, %c0_i32_0 : i32, i32
  }
  func.func @transform_16(%arg0: i32) -> (i32, i32, i32) {
    %c0_i32 = arith.constant 0 : i32
    %c0_i32_0 = arith.constant 0 : i32
    %c0_i32_1 = arith.constant 0 : i32
    return %arg0, %c0_i32, %c0_i32_0 : i32, i32, i32
  }
  func.func @transform_17(%arg0: i32) -> (i32, i32, i32) {
    %c0_i32 = arith.constant 0 : i32
    %c0_i32_0 = arith.constant 0 : i32
    %c0_i32_1 = arith.constant 0 : i32
    return %arg0, %c0_i32, %c0_i32_0 : i32, i32, i32
  }
  func.func @transform_18(%arg0: i32) -> (i32, i32, i32) {
    %c0_i32 = arith.constant 0 : i32
    %c0_i32_0 = arith.constant 0 : i32
    %c0_i32_1 = arith.constant 0 : i32
    return %arg0, %c0_i32, %c0_i32_0 : i32, i32, i32
  }
  func.func @transform_19(%arg0: i32) -> (i32, i32, i32) {
    %c0_i32 = arith.constant 0 : i32
    %c0_i32_0 = arith.constant 0 : i32
    %c0_i32_1 = arith.constant 0 : i32
    return %arg0, %c0_i32, %c0_i32_0 : i32, i32, i32
  }
}

</mosaic_0001>

<llo_original>
// kernel: dish_forward.1
$region0: #{dish_forward.1}
  #allocation0 [shape = 'u32[]', space=smem, size = 0x4, offset = 0x4, fixed_abs, tag = 'smem constant byte address 0x4 - core index']
  #allocation1 [shape = 'u32[144,128]{1,0:T(1,128)}', space=vmem, size = 0x12000, scoped, tag = 'internal scratch']
  %s0 = inlined_call_operand.vmem [shape: f32[2,8,4], index: 0, kind: input, shape index: {}]
  %s1 = inlined_call_operand.vmem [shape: f32[8,4], index: 1, kind: input, shape index: {}]
  %s2 = inlined_call_operand.vmem [shape: f32[1,1,4], index: 2, kind: input, shape index: {}]
  %s3 = inlined_call_operand.vmem [shape: f32[1,1,4], index: 3, kind: input, shape index: {}]
  %s4 = inlined_call_operand.vmem [shape: f32[8,3], index: 4, kind: input, shape index: {}]
  %s5 = inlined_call_operand.vmem [shape: f32[8,16], index: 5, kind: input, shape index: {}]
  %s6 = inlined_call_operand.vmem [shape: f32[1,16], index: 6, kind: input, shape index: {}]
  %s7 = inlined_call_operand.vmem [shape: f32[16,16], index: 7, kind: input, shape index: {}]
  %s8 = inlined_call_operand.vmem [shape: f32[1,16], index: 8, kind: input, shape index: {}]
  %s9 = inlined_call_operand.vmem [shape: f32[16,1], index: 9, kind: input, shape index: {}]
  %s10 = inlined_call_operand.vmem [shape: f32[8,3], index: 10, kind: input, shape index: {}]
  %s11 = inlined_call_operand.vmem [shape: f32[8,16], index: 11, kind: input, shape index: {}]
  %s12 = inlined_call_operand.vmem [shape: f32[1,16], index: 12, kind: input, shape index: {}]
  %s13 = inlined_call_operand.vmem [shape: f32[16,16], index: 13, kind: input, shape index: {}]
  %s14 = inlined_call_operand.vmem [shape: f32[1,16], index: 14, kind: input, shape index: {}]
  %s15 = inlined_call_operand.vmem [shape: f32[16,8], index: 15, kind: input, shape index: {}]
  %s16 = inlined_call_operand.vmem [shape: f32[2,8,4], index: 16, kind: output, shape index: {0}]
  %s17 = inlined_call_operand.vmem [shape: f32[2,8,4], index: 17, kind: output, shape index: {1}]
  %s18 = inlined_call_operand.vmem [shape: f32[2,1,1], index: 18, kind: output, shape index: {2}]
  %s19 = inlined_call_operand.hbm [shape: f32[2,1,8], index: 19, kind: output, shape index: {3}]
  %20 = xla_tuple %s16, %s17, %s18, %s19
  %s21 = sld [smem:[#allocation0]]
  $region121: #{dish_forward.1} parent=0
    _
  %s23 = ssub.s32 1, %s21
  %s24 = scalar_select 0, %s23, %s21
  $region1: #{dish_forward.1} parent=0
    #allocation2 [shape = 'u8[1024]{0}', space=vmem, size = 0x400, scoped, tag = 'output window, operand 3']
    #allocation3 [shape = 's32[2]{0}', space=sflag, size = 0x8, scoped, tag = 'scoped memory for dish_forward.1']
    %25 = vsyncpa [#allocation3], 0
    %s26 = scalar_lea.sflag [#allocation3], 1
    %27 = vsyncpa %s26, 0
    loop: start=0, step=1, limit=4
    $region2: #{dish_forward.1} parent=1 // loop_pre_header
      _
    $region3: #{dish_forward.1} parent=1 // loop_header
      %s29 = sphi 0, %s33
      %p30 = scmp.ge.s32.totalorder %s29, 4
      %s39 = sphi 0, %s41
      %s42 = sphi 0, %s39
      %s43 = sphi 0, %s42
      %s59 = sphi 0, %s43
      %s63 = sphi 0, %s63
      %s65 = sphi 0, %s63
      %s66 = sphi 0, %s65
      %s80 = sphi 0, %s66
      %s84 = sphi 0, %s84
      %s86 = sphi 0, %s84
      %s87 = sphi 0, %s86
      %s101 = sphi 0, %s87
      %s105 = sphi 0, %s105
      %s107 = sphi 0, %s105
      %s108 = sphi 0, %s107
      %s122 = sphi 0, %s108
      %s126 = sphi 0, %s126
      %s128 = sphi 0, %s126
      %s129 = sphi 0, %s128
      %s143 = sphi 0, %s129
      %s147 = sphi 0, %s147
      %s149 = sphi 0, %s147
      %s150 = sphi 0, %s149
      %s164 = sphi 0, %s150
      %s168 = sphi 0, %s168
      %s170 = sphi 0, %s168
      %s171 = sphi 0, %s170
      %s185 = sphi 0, %s171
      %s189 = sphi 0, %s189
      %s191 = sphi 0, %s189
      %s192 = sphi 0, %s191
      %s206 = sphi 0, %s192
      %s210 = sphi 0, %s210
      %s212 = sphi 0, %s210
      %s213 = sphi 0, %s212
      %s227 = sphi 0, %s213
      %s231 = sphi 0, %s231
      %s233 = sphi 0, %s231
      %s234 = sphi 0, %s233
      %s248 = sphi 0, %s234
      %s252 = sphi 0, %s252
      %s254 = sphi 0, %s252
      %s255 = sphi 0, %s254
      %s269 = sphi 0, %s255
      %s273 = sphi 0, %s273
      %s275 = sphi 0, %s273
      %s276 = sphi 0, %s275
      %s290 = sphi 0, %s276
      %s294 = sphi 0, %s294
      %s296 = sphi 0, %s294
      %s297 = sphi 0, %s296
      %s311 = sphi 0, %s297
      %s315 = sphi 0, %s315
      %s317 = sphi 0, %s315
      %s318 = sphi 0, %s317
      %s332 = sphi 0, %s318
      %s336 = sphi 0, %s336
      %s338 = sphi 0, %s336
      %s339 = sphi 0, %s338
      %s353 = sphi 0, %s339
      %s357 = sphi 0, %s357
      %s359 = sphi 0, %s357
      %s360 = sphi 0, %s359
      %s374 = sphi 0, %s360
      %s380 = sphi 0, %s382
      %s383 = sphi 0, %s380
      %s384 = sphi 0, %s383
      %s400 = sphi 0, %s384
      %s406 = sphi 0, %s408
      %s409 = sphi 0, %s406
      %s410 = sphi 0, %s409
      %s426 = sphi 0, %s410
      %s432 = sphi 0, %s434
      %s435 = sphi 0, %s432
      %s436 = sphi 0, %s435
      %s452 = sphi 0, %s436
      %s458 = sphi 0, %s460
      %s461 = sphi 0, %s458
      %s462 = sphi 0, %s461
      %s478 = sphi 0, %s462
    $region4: #{dish_forward.1} parent=1 // loop_header_branch
      %32 = sbr.rel (%p30) target = $region8
    $region5: #{dish_forward.1} parent=1 // loop_body
      %s34 = ssub.s32 %s29, 1
      %s35 = ssub.s32 %s29, 2
      %s36 = sadd.s32 %s29, 1
      %s37 = ssub.s32 %s29, %s36
      %p38 = scmp.eq.s32.totalorder %s37, 0
      %s40 = sadd.s32 %s39, 1
      %s41 = scalar_select %p38, %s39, %s40
      %p44 = pneg %p38
      %p45 = scmp.eq.s32.totalorder %s29, 1
      %p46 = por %p44, %p45
      %p47 = scmp.ne.s32.totalorder %s39, %s42
      %p48 = scmp.eq.s32.totalorder %s29, 0
      %p49 = por %p47, %p48
      %p50 = scmp.ne.s32.totalorder %s39, %s42
      %p51 = scmp.eq.s32.totalorder %s34, 1
      %p52 = por %p50, %p51
      %p53 = scmp.ne.s32.totalorder %s42, %s43
      %p54 = scmp.eq.s32.totalorder %s34, 0
      %p55 = por %p53, %p54
      %p56 = scmp.ne.s32.totalorder %s42, %s43
      %p57 = scmp.eq.s32.totalorder %s35, 1
      %p58 = por %p56, %p57
      %p60 = scmp.ne.s32.totalorder %s43, %s59
      %p61 = scmp.eq.s32.totalorder %s35, 0
      %p62 = por %p60, %p61
      %s64 = sadd.s32 %s63, 1
      %p67 = scmp.eq.s32.totalorder %s29, 1
      %p68 = scmp.ne.s32.totalorder %s63, %s65
      %p69 = scmp.eq.s32.totalorder %s29, 0
      %p70 = por %p68, %p69
      %p71 = scmp.ne.s32.totalorder %s63, %s65
      %p72 = scmp.eq.s32.totalorder %s34, 1
      %p73 = por %p71, %p72
      %p74 = scmp.ne.s32.totalorder %s65, %s66
      %p75 = scmp.eq.s32.totalorder %s34, 0
      %p76 = por %p74, %p75
      %p77 = scmp.ne.s32.totalorder %s65, %s66
      %p78 = scmp.eq.s32.totalorder %s35, 1
      %p79 = por %p77, %p78
      %p81 = scmp.ne.s32.totalorder %s66, %s80
      %p82 = scmp.eq.s32.totalorder %s35, 0
      %p83 = por %p81, %p82
      %s85 = sadd.s32 %s84, 1
      %p88 = scmp.eq.s32.totalorder %s29, 1
      %p89 = scmp.ne.s32.totalorder %s84, %s86
      %p90 = scmp.eq.s32.totalorder %s29, 0
      %p91 = por %p89, %p90
      %p92 = scmp.ne.s32.totalorder %s84, %s86
      %p93 = scmp.eq.s32.totalorder %s34, 1
      %p94 = por %p92, %p93
      %p95 = scmp.ne.s32.totalorder %s86, %s87
      %p96 = scmp.eq.s32.totalorder %s34, 0
      %p97 = por %p95, %p96
      %p98 = scmp.ne.s32.totalorder %s86, %s87
      %p99 = scmp.eq.s32.totalorder %s35, 1
      %p100 = por %p98, %p99
      %p102 = scmp.ne.s32.totalorder %s87, %s101
      %p103 = scmp.eq.s32.totalorder %s35, 0
      %p104 = por %p102, %p103
      %s106 = sadd.s32 %s105, 1
      %p109 = scmp.eq.s32.totalorder %s29, 1
      %p110 = scmp.ne.s32.totalorder %s105, %s107
      %p111 = scmp.eq.s32.totalorder %s29, 0
      %p112 = por %p110, %p111
      %p113 = scmp.ne.s32.totalorder %s105, %s107
      %p114 = scmp.eq.s32.totalorder %s34, 1
      %p115 = por %p113, %p114
      %p116 = scmp.ne.s32.totalorder %s107, %s108
      %p117 = scmp.eq.s32.totalorder %s34, 0
      %p118 = por %p116, %p117
      %p119 = scmp.ne.s32.totalorder %s107, %s108
      %p120 = scmp.eq.s32.totalorder %s35, 1
      %p121 = por %p119, %p120
      %p123 = scmp.ne.s32.totalorder %s108, %s122
      %p124 = scmp.eq.s32.totalorder %s35, 0
      %p125 = por %p123, %p124
      %s127 = sadd.s32 %s126, 1
      %p130 = scmp.eq.s32.totalorder %s29, 1
      %p131 = scmp.ne.s32.totalorder %s126, %s128
      %p132 = scmp.eq.s32.totalorder %s29, 0
      %p133 = por %p131, %p132
      %p134 = scmp.ne.s32.totalorder %s126, %s128
      %p135 = scmp.eq.s32.totalorder %s34, 1
      %p136 = por %p134, %p135
      %p137 = scmp.ne.s32.totalorder %s128, %s129
      %p138 = scmp.eq.s32.totalorder %s34, 0
      %p139 = por %p137, %p138
      %p140 = scmp.ne.s32.totalorder %s128, %s129
      %p141 = scmp.eq.s32.totalorder %s35, 1
      %p142 = por %p140, %p141
      %p144 = scmp.ne.s32.totalorder %s129, %s143
      %p145 = scmp.eq.s32.totalorder %s35, 0
      %p146 = por %p144, %p145
      %s148 = sadd.s32 %s147, 1
      %p151 = scmp.eq.s32.totalorder %s29, 1
      %p152 = scmp.ne.s32.totalorder %s147, %s149
      %p153 = scmp.eq.s32.totalorder %s29, 0
      %p154 = por %p152, %p153
      %p155 = scmp.ne.s32.totalorder %s147, %s149
      %p156 = scmp.eq.s32.totalorder %s34, 1
      %p157 = por %p155, %p156
      %p158 = scmp.ne.s32.totalorder %s149, %s150
      %p159 = scmp.eq.s32.totalorder %s34, 0
      %p160 = por %p158, %p159
      %p161 = scmp.ne.s32.totalorder %s149, %s150
      %p162 = scmp.eq.s32.totalorder %s35, 1
      %p163 = por %p161, %p162
      %p165 = scmp.ne.s32.totalorder %s150, %s164
      %p166 = scmp.eq.s32.totalorder %s35, 0
      %p167 = por %p165, %p166
      %s169 = sadd.s32 %s168, 1
      %p172 = scmp.eq.s32.totalorder %s29, 1
      %p173 = scmp.ne.s32.totalorder %s168, %s170
      %p174 = scmp.eq.s32.totalorder %s29, 0
      %p175 = por %p173, %p174
      %p176 = scmp.ne.s32.totalorder %s168, %s170
      %p177 = scmp.eq.s32.totalorder %s34, 1
      %p178 = por %p176, %p177
      %p179 = scmp.ne.s32.totalorder %s170, %s171
      %p180 = scmp.eq.s32.totalorder %s34, 0
      %p181 = por %p179, %p180
      %p182 = scmp.ne.s32.totalorder %s170, %s171
      %p183 = scmp.eq.s32.totalorder %s35, 1
      %p184 = por %p182, %p183
      %p186 = scmp.ne.s32.totalorder %s171, %s185
      %p187 = scmp.eq.s32.totalorder %s35, 0
      %p188 = por %p186, %p187
      %s190 = sadd.s32 %s189, 1
      %p193 = scmp.eq.s32.totalorder %s29, 1
      %p194 = scmp.ne.s32.totalorder %s189, %s191
      %p195 = scmp.eq.s32.totalorder %s29, 0
      %p196 = por %p194, %p195
      %p197 = scmp.ne.s32.totalorder %s189, %s191
      %p198 = scmp.eq.s32.totalorder %s34, 1
      %p199 = por %p197, %p198
      %p200 = scmp.ne.s32.totalorder %s191, %s192
      %p201 = scmp.eq.s32.totalorder %s34, 0
      %p202 = por %p200, %p201
      %p203 = scmp.ne.s32.totalorder %s191, %s192
      %p204 = scmp.eq.s32.totalorder %s35, 1
      %p205 = por %p203, %p204
      %p207 = scmp.ne.s32.totalorder %s192, %s206
      %p208 = scmp.eq.s32.totalorder %s35, 0
      %p209 = por %p207, %p208
      %s211 = sadd.s32 %s210, 1
      %p214 = scmp.eq.s32.totalorder %s29, 1
      %p215 = scmp.ne.s32.totalorder %s210, %s212
      %p216 = scmp.eq.s32.totalorder %s29, 0
      %p217 = por %p215, %p216
      %p218 = scmp.ne.s32.totalorder %s210, %s212
      %p219 = scmp.eq.s32.totalorder %s34, 1
      %p220 = por %p218, %p219
      %p221 = scmp.ne.s32.totalorder %s212, %s213
      %p222 = scmp.eq.s32.totalorder %s34, 0
      %p223 = por %p221, %p222
      %p224 = scmp.ne.s32.totalorder %s212, %s213
      %p225 = scmp.eq.s32.totalorder %s35, 1
      %p226 = por %p224, %p225
      %p228 = scmp.ne.s32.totalorder %s213, %s227
      %p229 = scmp.eq.s32.totalorder %s35, 0
      %p230 = por %p228, %p229
      %s232 = sadd.s32 %s231, 1
      %p235 = scmp.eq.s32.totalorder %s29, 1
      %p236 = scmp.ne.s32.totalorder %s231, %s233
      %p237 = scmp.eq.s32.totalorder %s29, 0
      %p238 = por %p236, %p237
      %p239 = scmp.ne.s32.totalorder %s231, %s233
      %p240 = scmp.eq.s32.totalorder %s34, 1
      %p241 = por %p239, %p240
      %p242 = scmp.ne.s32.totalorder %s233, %s234
      %p243 = scmp.eq.s32.totalorder %s34, 0
      %p244 = por %p242, %p243
      %p245 = scmp.ne.s32.totalorder %s233, %s234
      %p246 = scmp.eq.s32.totalorder %s35, 1
      %p247 = por %p245, %p246
      %p249 = scmp.ne.s32.totalorder %s234, %s248
      %p250 = scmp.eq.s32.totalorder %s35, 0
      %p251 = por %p249, %p250
      %s253 = sadd.s32 %s252, 1
      %p256 = scmp.eq.s32.totalorder %s29, 1
      %p257 = scmp.ne.s32.totalorder %s252, %s254
      %p258 = scmp.eq.s32.totalorder %s29, 0
      %p259 = por %p257, %p258
      %p260 = scmp.ne.s32.totalorder %s252, %s254
      %p261 = scmp.eq.s32.totalorder %s34, 1
      %p262 = por %p260, %p261
      %p263 = scmp.ne.s32.totalorder %s254, %s255
      %p264 = scmp.eq.s32.totalorder %s34, 0
      %p265 = por %p263, %p264
      %p266 = scmp.ne.s32.totalorder %s254, %s255
      %p267 = scmp.eq.s32.totalorder %s35, 1
      %p268 = por %p266, %p267
      %p270 = scmp.ne.s32.totalorder %s255, %s269
      %p271 = scmp.eq.s32.totalorder %s35, 0
      %p272 = por %p270, %p271
      %s274 = sadd.s32 %s273, 1
      %p277 = scmp.eq.s32.totalorder %s29, 1
      %p278 = scmp.ne.s32.totalorder %s273, %s275
      %p279 = scmp.eq.s32.totalorder %s29, 0
      %p280 = por %p278, %p279
      %p281 = scmp.ne.s32.totalorder %s273, %s275
      %p282 = scmp.eq.s32.totalorder %s34, 1
      %p283 = por %p281, %p282
      %p284 = scmp.ne.s32.totalorder %s275, %s276
      %p285 = scmp.eq.s32.totalorder %s34, 0
      %p286 = por %p284, %p285
      %p287 = scmp.ne.s32.totalorder %s275, %s276
      %p288 = scmp.eq.s32.totalorder %s35, 1
      %p289 = por %p287, %p288
      %p291 = scmp.ne.s32.totalorder %s276, %s290
      %p292 = scmp.eq.s32.totalorder %s35, 0
      %p293 = por %p291, %p292
      %s295 = sadd.s32 %s294, 1
      %p298 = scmp.eq.s32.totalorder %s29, 1
      %p299 = scmp.ne.s32.totalorder %s294, %s296
      %p300 = scmp.eq.s32.totalorder %s29, 0
      %p301 = por %p299, %p300
      %p302 = scmp.ne.s32.totalorder %s294, %s296
      %p303 = scmp.eq.s32.totalorder %s34, 1
      %p304 = por %p302, %p303
      %p305 = scmp.ne.s32.totalorder %s296, %s297
      %p306 = scmp.eq.s32.totalorder %s34, 0
      %p307 = por %p305, %p306
      %p308 = scmp.ne.s32.totalorder %s296, %s297
      %p309 = scmp.eq.s32.totalorder %s35, 1
      %p310 = por %p308, %p309
      %p312 = scmp.ne.s32.totalorder %s297, %s311
      %p313 = scmp.eq.s32.totalorder %s35, 0
      %p314 = por %p312, %p313
      %s316 = sadd.s32 %s315, 1
      %p319 = scmp.eq.s32.totalorder %s29, 1
      %p320 = scmp.ne.s32.totalorder %s315, %s317
      %p321 = scmp.eq.s32.totalorder %s29, 0
      %p322 = por %p320, %p321
      %p323 = scmp.ne.s32.totalorder %s315, %s317
      %p324 = scmp.eq.s32.totalorder %s34, 1
      %p325 = por %p323, %p324
      %p326 = scmp.ne.s32.totalorder %s317, %s318
      %p327 = scmp.eq.s32.totalorder %s34, 0
      %p328 = por %p326, %p327
      %p329 = scmp.ne.s32.totalorder %s317, %s318
      %p330 = scmp.eq.s32.totalorder %s35, 1
      %p331 = por %p329, %p330
      %p333 = scmp.ne.s32.totalorder %s318, %s332
      %p334 = scmp.eq.s32.totalorder %s35, 0
      %p335 = por %p333, %p334
      %s337 = sadd.s32 %s336, 1
      %p340 = scmp.eq.s32.totalorder %s29, 1
      %p341 = scmp.ne.s32.totalorder %s336, %s338
      %p342 = scmp.eq.s32.totalorder %s29, 0
      %p343 = por %p341, %p342
      %p344 = scmp.ne.s32.totalorder %s336, %s338
      %p345 = scmp.eq.s32.totalorder %s34, 1
      %p346 = por %p344, %p345
      %p347 = scmp.ne.s32.totalorder %s338, %s339
      %p348 = scmp.eq.s32.totalorder %s34, 0
      %p349 = por %p347, %p348
      %p350 = scmp.ne.s32.totalorder %s338, %s339
      %p351 = scmp.eq.s32.totalorder %s35, 1
      %p352 = por %p350, %p351
      %p354 = scmp.ne.s32.totalorder %s339, %s353
      %p355 = scmp.eq.s32.totalorder %s35, 0
      %p356 = por %p354, %p355
      %s358 = sadd.s32 %s357, 1
      %p361 = scmp.eq.s32.totalorder %s29, 1
      %p362 = scmp.ne.s32.totalorder %s357, %s359
      %p363 = scmp.eq.s32.totalorder %s29, 0
      %p364 = por %p362, %p363
      %p365 = scmp.ne.s32.totalorder %s357, %s359
      %p366 = scmp.eq.s32.totalorder %s34, 1
      %p367 = por %p365, %p366
      %p368 = scmp.ne.s32.totalorder %s359, %s360
      %p369 = scmp.eq.s32.totalorder %s34, 0
      %p370 = por %p368, %p369
      %p371 = scmp.ne.s32.totalorder %s359, %s360
      %p372 = scmp.eq.s32.totalorder %s35, 1
      %p373 = por %p371, %p372
      %p375 = scmp.ne.s32.totalorder %s360, %s374
      %p376 = scmp.eq.s32.totalorder %s35, 0
      %p377 = por %p375, %p376
      %s378 = ssub.s32 %s29, %s36
      %p379 = scmp.eq.s32.totalorder %s378, 0
      %s381 = sadd.s32 %s380, 1
      %s382 = scalar_select %p379, %s380, %s381
      %p385 = pneg %p379
      %p386 = scmp.eq.s32.totalorder %s29, 1
      %p387 = por %p385, %p386
      %p388 = scmp.ne.s32.totalorder %s380, %s383
      %p389 = scmp.eq.s32.totalorder %s29, 0
      %p390 = por %p388, %p389
      %p391 = scmp.ne.s32.totalorder %s380, %s383
      %p392 = scmp.eq.s32.totalorder %s34, 1
      %p393 = por %p391, %p392
      %p394 = scmp.ne.s32.totalorder %s383, %s384
      %p395 = scmp.eq.s32.totalorder %s34, 0
      %p396 = por %p394, %p395
      %p397 = scmp.ne.s32.totalorder %s383, %s384
      %p398 = scmp.eq.s32.totalorder %s35, 1
      %p399 = por %p397, %p398
      %p401 = scmp.ne.s32.totalorder %s384, %s400
      %p402 = scmp.eq.s32.totalorder %s35, 0
      %p403 = por %p401, %p402
      %s404 = ssub.s32 %s29, %s36
      %p405 = scmp.eq.s32.totalorder %s404, 0
      %s407 = sadd.s32 %s406, 1
      %s408 = scalar_select %p405, %s406, %s407
      %p411 = pneg %p405
      %p412 = scmp.eq.s32.totalorder %s29, 1
      %p413 = por %p411, %p412
      %p414 = scmp.ne.s32.totalorder %s406, %s409
      %p415 = scmp.eq.s32.totalorder %s29, 0
      %p416 = por %p414, %p415
      %p417 = scmp.ne.s32.totalorder %s406, %s409
      %p418 = scmp.eq.s32.totalorder %s34, 1
      %p419 = por %p417, %p418
      %p420 = scmp.ne.s32.totalorder %s409, %s410
      %p421 = scmp.eq.s32.totalorder %s34, 0
      %p422 = por %p420, %p421
      %p423 = scmp.ne.s32.totalorder %s409, %s410
      %p424 = scmp.eq.s32.totalorder %s35, 1
      %p425 = por %p423, %p424
      %p427 = scmp.ne.s32.totalorder %s410, %s426
      %p428 = scmp.eq.s32.totalorder %s35, 0
      %p429 = por %p427, %p428
      %s430 = ssub.s32 %s29, %s36
      %p431 = scmp.eq.s32.totalorder %s430, 0
      %s433 = sadd.s32 %s432, 1
      %s434 = scalar_select %p431, %s432, %s433
      %p437 = pneg %p431
      %p438 = scmp.eq.s32.totalorder %s29, 1
      %p439 = por %p437, %p438
      %p440 = scmp.ne.s32.totalorder %s432, %s435
      %p441 = scmp.eq.s32.totalorder %s29, 0
      %p442 = por %p440, %p441
      %p443 = scmp.ne.s32.totalorder %s432, %s435
      %p444 = scmp.eq.s32.totalorder %s34, 1
      %p445 = por %p443, %p444
      %p446 = scmp.ne.s32.totalorder %s435, %s436
      %p447 = scmp.eq.s32.totalorder %s34, 0
      %p448 = por %p446, %p447
      %p449 = scmp.ne.s32.totalorder %s435, %s436
      %p450 = scmp.eq.s32.totalorder %s35, 1
      %p451 = por %p449, %p450
      %p453 = scmp.ne.s32.totalorder %s436, %s452
      %p454 = scmp.eq.s32.totalorder %s35, 0
      %p455 = por %p453, %p454
      %s456 = ssub.s32 %s29, %s36
      %p457 = scmp.eq.s32.totalorder %s456, 0
      %s459 = sadd.s32 %s458, 1
      %s460 = scalar_select %p457, %s458, %s459
      %p463 = pneg %p457
      %p464 = scmp.eq.s32.totalorder %s29, 1
      %p465 = por %p463, %p464
      %p466 = scmp.ne.s32.totalorder %s458, %s461
      %p467 = scmp.eq.s32.totalorder %s29, 0
      %p468 = por %p466, %p467
      %p469 = scmp.ne.s32.totalorder %s458, %s461
      %p470 = scmp.eq.s32.totalorder %s34, 1
      %p471 = por %p469, %p470
      %p472 = scmp.ne.s32.totalorder %s461, %s462
      %p473 = scmp.eq.s32.totalorder %s34, 0
      %p474 = por %p472, %p473
      %p475 = scmp.ne.s32.totalorder %s461, %s462
      %p476 = scmp.eq.s32.totalorder %s35, 1
      %p477 = por %p475, %p476
      %p479 = scmp.ne.s32.totalorder %s462, %s478
      %p480 = scmp.eq.s32.totalorder %s35, 0
      %p481 = por %p479, %p480
      %p482 = scmp.le.s32.totalorder 1, %s29
      %p483 = scmp.lt.s32.totalorder %s29, 3
      %p484 = pnand %p482, %p483
      %p485 = pneg %p484
      // Predicated region
      $region9: #{dish_forward.1} parent=5 // pred_check
        _
      $region10: #{dish_forward.1} parent=5 // pred_check_branch
        %487 = sbr.rel (%p484) target = $region12
      $region11: #{dish_forward.1} parent=5 // pred_region
        %s488 = ssub.s32 %s29, 1
        // Predicated region
        $region13: #{dish_forward.1} parent=11 // pred_check
          %p489 = pneg %p76
        $region14: #{dish_forward.1} parent=11 // pred_check_branch
          %491 = sbr.rel (%p489) target = $region16
        $region15: #{dish_forward.1} parent=11 // pred_region
          _
        $region16: #{dish_forward.1} parent=11 // pred_fallthru
          _
        // Predicated region
        $region17: #{dish_forward.1} parent=11 // pred_check
          %p492 = pneg %p97
        $region18: #{dish_forward.1} parent=11 // pred_check_branch
          %494 = sbr.rel (%p492) target = $region20
        $region19: #{dish_forward.1} parent=11 // pred_region
          _
        $region20: #{dish_forward.1} parent=11 // pred_fallthru
          _
        // Predicated region
        $region21: #{dish_forward.1} parent=11 // pred_check
          %p495 = pneg %p118
        $region22: #{dish_forward.1} parent=11 // pred_check_branch
          %497 = sbr.rel (%p495) target = $region24
        $region23: #{dish_forward.1} parent=11 // pred_region
          _
        $region24: #{dish_forward.1} parent=11 // pred_fallthru
          _
        // Predicated region
        $region25: #{dish_forward.1} parent=11 // pred_check
          %p498 = pneg %p139
        $region26: #{dish_forward.1} parent=11 // pred_check_branch
          %500 = sbr.rel (%p498) target = $region28
        $region27: #{dish_forward.1} parent=11 // pred_region
          _
        $region28: #{dish_forward.1} parent=11 // pred_fallthru
          _
        // Predicated region
        $region29: #{dish_forward.1} parent=11 // pred_check
          %p501 = pneg %p160
        $region30: #{dish_forward.1} parent=11 // pred_check_branch
          %503 = sbr.rel (%p501) target = $region32
        $region31: #{dish_forward.1} parent=11 // pred_region
          _
        $region32: #{dish_forward.1} parent=11 // pred_fallthru
          _
        // Predicated region
        $region33: #{dish_forward.1} parent=11 // pred_check
          %p504 = pneg %p181
        $region34: #{dish_forward.1} parent=11 // pred_check_branch
          %506 = sbr.rel (%p504) target = $region36
        $region35: #{dish_forward.1} parent=11 // pred_region
          _
        $region36: #{dish_forward.1} parent=11 // pred_fallthru
          _
        // Predicated region
        $region37: #{dish_forward.1} parent=11 // pred_check
          %p507 = pneg %p202
        $region38: #{dish_forward.1} parent=11 // pred_check_branch
          %509 = sbr.rel (%p507) target = $region40
        $region39: #{dish_forward.1} parent=11 // pred_region
          _
        $region40: #{dish_forward.1} parent=11 // pred_fallthru
          _
        // Predicated region
        $region41: #{dish_forward.1} parent=11 // pred_check
          %p510 = pneg %p223
        $region42: #{dish_forward.1} parent=11 // pred_check_branch
          %512 = sbr.rel (%p510) target = $region44
        $region43: #{dish_forward.1} parent=11 // pred_region
          _
        $region44: #{dish_forward.1} parent=11 // pred_fallthru
          _
        // Predicated region
        $region45: #{dish_forward.1} parent=11 // pred_check
          %p513 = pneg %p244
        $region46: #{dish_forward.1} parent=11 // pred_check_branch
          %515 = sbr.rel (%p513) target = $region48
        $region47: #{dish_forward.1} parent=11 // pred_region
          _
        $region48: #{dish_forward.1} parent=11 // pred_fallthru
          _
        // Predicated region
        $region49: #{dish_forward.1} parent=11 // pred_check
          %p516 = pneg %p265
        $region50: #{dish_forward.1} parent=11 // pred_check_branch
          %518 = sbr.rel (%p516) target = $region52
        $region51: #{dish_forward.1} parent=11 // pred_region
          _
        $region52: #{dish_forward.1} parent=11 // pred_fallthru
          _
        // Predicated region
        $region53: #{dish_forward.1} parent=11 // pred_check
          %p519 = pneg %p286
        $region54: #{dish_forward.1} parent=11 // pred_check_branch
          %521 = sbr.rel (%p519) target = $region56
        $region55: #{dish_forward.1} parent=11 // pred_region
          _
        $region56: #{dish_forward.1} parent=11 // pred_fallthru
          _
        // Predicated region
        $region57: #{dish_forward.1} parent=11 // pred_check
          %p522 = pneg %p307
        $region58: #{dish_forward.1} parent=11 // pred_check_branch
          %524 = sbr.rel (%p522) target = $region60
        $region59: #{dish_forward.1} parent=11 // pred_region
          _
        $region60: #{dish_forward.1} parent=11 // pred_fallthru
          _
        // Predicated region
        $region61: #{dish_forward.1} parent=11 // pred_check
          %p525 = pneg %p328
        $region62: #{dish_forward.1} parent=11 // pred_check_branch
          %527 = sbr.rel (%p525) target = $region64
        $region63: #{dish_forward.1} parent=11 // pred_region
          _
        $region64: #{dish_forward.1} parent=11 // pred_fallthru
          _
        // Predicated region
        $region65: #{dish_forward.1} parent=11 // pred_check
          %p528 = pneg %p349
        $region66: #{dish_forward.1} parent=11 // pred_check_branch
          %530 = sbr.rel (%p528) target = $region68
        $region67: #{dish_forward.1} parent=11 // pred_region
          _
        $region68: #{dish_forward.1} parent=11 // pred_fallthru
          _
        // Predicated region
        $region69: #{dish_forward.1} parent=11 // pred_check
          %p531 = pneg %p370
        $region70: #{dish_forward.1} parent=11 // pred_check_branch
          %533 = sbr.rel (%p531) target = $region72
        $region71: #{dish_forward.1} parent=11 // pred_region
          _
        $region72: #{dish_forward.1} parent=11 // pred_fallthru
          _
      $region12: #{dish_forward.1} parent=5 // pred_fallthru
        _
      %p534 = scmp.lt.s32.totalorder %s29, 2
      // Predicated region
      $region73: #{dish_forward.1} parent=5 // pred_check
        %p535 = pneg %p534
      $region74: #{dish_forward.1} parent=5 // pred_check_branch
        %537 = sbr.rel (%p535) target = $region76
      $region75: #{dish_forward.1} parent=5 // pred_region
        // Predicated region
        $region77: #{dish_forward.1} parent=75 // pred_check
          %p538 = pneg %p49
        $region78: #{dish_forward.1} parent=75 // pred_check_branch
          %540 = sbr.rel (%p538) target = $region80
        $region79: #{dish_forward.1} parent=75 // pred_region
          %p541 = scmp.lt.s32.totalorder %s29, 1
          %s542 = scalar_select %p541, %s29, 1
          %s543 = smul.addr %s542, 8
          %s544 = scalar_lea.vmem %s0, %s543
        $region80: #{dish_forward.1} parent=75 // pred_fallthru
          _
      $region76: #{dish_forward.1} parent=5 // pred_fallthru
        _
      %p545 = scmp.le.s32.totalorder 1, %s29
      %p546 = scmp.lt.s32.totalorder %s29, 3
      %p547 = pnand %p545, %p546
      %p548 = pneg %p547
      // Predicated region
      $region81: #{dish_forward.1} parent=5 // pred_check
        _
      $region82: #{dish_forward.1} parent=5 // pred_check_branch
        %550 = sbr.rel (%p547) target = $region84
      $region83: #{dish_forward.1} parent=5 // pred_region
        %s551 = ssub.s32 %s29, 1
        %p552 = scmp.lt.s32.totalorder %s34, 1
        %s553 = scalar_select %p552, %s34, 1
        %s554 = smul.addr %s553, 8
        %s555 = scalar_lea.vmem %s0, %s554
        %p556 = pneg %p55
        %p557 = pneg %p52
        %p558 = pneg %p76
        %p559 = pneg %p73
        %p560 = pneg %p97
        %p561 = pneg %p94
        %p562 = pneg %p118
        %p563 = pneg %p115
        %p564 = pneg %p139
        %p565 = pneg %p136
        %p566 = pneg %p160
        %p567 = pneg %p157
        %p568 = pneg %p181
        %p569 = pneg %p178
        %p570 = pneg %p202
        %p571 = pneg %p199
        %p572 = pneg %p223
        %p573 = pneg %p220
        %p574 = pneg %p244
        %p575 = pneg %p241
        %p576 = pneg %p265
        %p577 = pneg %p262
        %p578 = pneg %p286
        %p579 = pneg %p283
        %p580 = pneg %p307
        %p581 = pneg %p304
        %p582 = pneg %p328
        %p583 = pneg %p325
        %p584 = pneg %p349
        %p585 = pneg %p346
        %p586 = pneg %p370
        %p587 = pneg %p367
        %p588 = pneg %p396
        %p589 = pneg %p393
        %p590 = scmp.lt.s32.totalorder %s34, 1
        %s591 = scalar_select %p590, %s34, 1
        %s592 = smul.addr %s591, 8
        %s593 = scalar_lea.vmem %s16, %s592
        %p594 = pneg %p422
        %p595 = pneg %p419
        %p596 = scmp.lt.s32.totalorder %s34, 1
        %s597 = scalar_select %p596, %s34, 1
        %s598 = smul.addr %s597, 8
        %s599 = scalar_lea.vmem %s17, %s598
        %p600 = pneg %p448
        %p601 = pneg %p445
        %p602 = scmp.lt.s32.totalorder %s34, 1
        %s603 = scalar_select %p602, %s34, 1
        %s604 = scalar_lea.vmem %s18, %s603
        %p605 = pneg %p474
        %p606 = pneg %p471
        %s607 = sand.u32 %s461, 1
        %s608 = scalar_lea.sflag [#allocation3], %s607
        %s609 = sand.u32 %s461, 1
        %s610 = scalar_lea.vmem [#allocation2], %s609
        %p611 = scmp.lt.s32.totalorder %s34, 1
        %s612 = scalar_select %p611, %s34, 1
        %s613 = smul.addr %s612, 8
        %s614 = scalar_lea.vmem %s0, %s613
        %p615 = scmp.lt.s32.totalorder %s34, 1
        %s616 = scalar_select %p615, %s34, 1
        %s617 = smul.addr %s616, 8
        %s618 = scalar_lea.vmem %s16, %s617
        %p619 = scmp.lt.s32.totalorder %s34, 1
        %s620 = scalar_select %p619, %s34, 1
        %s621 = smul.addr %s620, 8
        %s622 = scalar_lea.vmem %s17, %s621
        %p623 = scmp.lt.s32.totalorder %s34, 1
        %s624 = scalar_select %p623, %s34, 1
        %s625 = scalar_lea.vmem %s18, %s624
        %v626 = vld [vmem:[%s614] sm:$0xff]
        %vm627 = vcmask 31744
        %v628 = vsel %vm627, %v626, 0.0
        %v629 = vrot.slane %v628, 4
        %v630 = vadd.f32 %v628, %v629
        %v631 = vrot.slane %v630, 2
        %v632 = vadd.f32 %v630, %v631
        %v633 = vrot.slane %v632, 1
        %v634 = vadd.f32 %v632, %v633
        %v635 = vrcp.pop 8.0
        %v636 = vmul.f32 %v634, %v635
        %v637 = vsub.f32 %v626, %v636
        %v638 = vmul.f32 %v637, %v637
        %v639 = vsel %vm627, %v638, 0.0
        %v640 = vrot.slane %v639, 4
        %v641 = vadd.f32 %v639, %v640
        %v642 = vrot.slane %v641, 2
        %v643 = vadd.f32 %v641, %v642
        %v644 = vrot.slane %v643, 1
        %v645 = vadd.f32 %v643, %v644
        %v646 = vmul.f32 %v645, %v635
        %v647 = vadd.f32 %v646, 1e-05
        %v648 = vrsqrt.pop %v647
        %v649 = vmul.f32 %v637, %v648
        %v650 = vld [vmem:[%s1] sm:$0xff]
        %v651 = vmul.f32 %v649, %v650
        %v652 = vsel %vm627, %v651, 0.0
        %v653 = vrot.slane %v652, 4
        %v654 = vadd.f32 %v652, %v653
        %v655 = vrot.slane %v654, 2
        %v656 = vadd.f32 %v654, %v655
        %v657 = vrot.slane %v656, 1
        %v658 = vadd.f32 %v656, %v657
        %v659 = vmul.f32 %v658, 0.5
        %v660 = vmul.f32 %v658, 0.70710677
        %v661 = vand.u32 2147483647, %v660
        %v662 = vmul.f32 %v661, 0.3275911
        %v663 = vadd.f32 %v662, 1.0
        %v664 = vrcp.pop %v663
        %v665 = vmul.f32 1.0, %v664
        %v666 = vmul.f32 %v665, 1.0614054
        %v667 = vadd.f32 %v666, -1.4531521
        %v668 = vmul.f32 %v665, %v667
        %v669 = vadd.f32 %v668, 1.4214138
        %v670 = vmul.f32 %v665, %v669
        %v671 = vadd.f32 %v670, -0.28449672
        %v672 = vmul.f32 %v665, %v671
        %v673 = vadd.f32 %v672, 0.2548296
        %v674 = vmul.f32 %v665, %v673
        %v675 = vmul.f32 %v661, %v661
        %v676 = vsub.f32 0.0, %v675
        %v677 = vmul.f32 %v676, 1.442695
        %v678 = vpow.pop %v677
        %v679 = vmul.f32 %v674, %v678
        %v680 = vsub.f32 1.0, %v679
        %vm681 = vcmp.ge.f32.partialorder %v660, 0.0
        %v682 = vsub.f32 0.0, %v680
        %v683 = vsel %vm681, %v680, %v682
        %v684 = vadd.f32 %v683, 1.0
        %v685 = vmul.f32 %v659, %v684
        %v686 = vsub.f32 %v649, %v685
        %v687 = vmul.f32 %v686, %v686
        %v688 = vsel %vm627, %v687, 0.0
        %v689 = vrot.slane %v688, 4
        %v690 = vadd.f32 %v688, %v689
        %v691 = vrot.slane %v690, 2
        %v692 = vadd.f32 %v690, %v691
        %v693 = vrot.slane %v692, 1
        %v694 = vadd.f32 %v692, %v693
        %v695 = vmul.f32 %v694, 0.14285715
        %v696 = vld [vmem:[%s2] sm:$0x1]
        %v697 = vadd.f32 %v695, 1e-08
        %v698 = vrsqrt.pop %v697
        %v699 = vmul.f32 %v696, %v698
        %v700 = vld [vmem:[%s3] sm:$0x1]
        %v702 = vlaneseq
        %v703 = vshrl.u32 %v702, 7
        %v704 = vsub.s32 0, %v703
        %v705 = vrot.slane %v699, %v704
        %v707 = vmul.f32 %v686, %v705
        %v709 = vlaneseq
        %v710 = vshrl.u32 %v709, 7
        %v711 = vsub.s32 0, %v710
        %v712 = vrot.slane %v700, %v711
        %v714 = vadd.f32 %v707, %v712
        %715 = vst.msk [vmem:[%s618] sm:$0xff] %vm627, %v714
        %v716 = vmul.f32 %v685, %v699
        %v717 = vsub.f32 %v700, %v716
        %vm718 = vcmask 27648
        %719 = vst.msk [vmem:[%s622] sm:$0xf] %vm718, %v714
        %v721 = vlaneseq
        %v722 = vshrl.u32 %v721, 7
        %v723 = vsub.s32 0, %v722
        %v724 = vrot.slane %v717, %v723
        %726 = vst.msk [vmem:[%s622 + $0x4] sm:$0xf] %vm718, %v724
        %v727 = vld [vmem:[%s4] sm:$0xff]
        %v728 = vld [vmem:[%s10] sm:$0xff]
        %730 = vset.pattern.permute.xlu0 0
        %731 = vperm.xlu0 %730, %v727
        %v732 = vpop.permute.xlu0 %731
        %v734 = vmul.f32 %v626, %v732
        %v735 = vsel %vm627, %v734, 0.0
        %v736 = vrot.slane %v735, 4
        %v737 = vadd.f32 %v735, %v736
        %v738 = vrot.slane %v737, 2
        %v739 = vadd.f32 %v737, %v738
        %v740 = vrot.slane %v739, 1
        %v741 = vadd.f32 %v739, %v740
        %743 = vrot.lane.b32.xlu0 %v741, 125
        %v744 = vpop.permute.xlu0 %743
        %746 = vrot.lane.b32.xlu0 %v741, 1
        %v747 = vpop.permute.xlu0 %746
        %vm749 = vcmask 7168
        %v750 = vsel %vm749, %v744, %v747
        %751 = vset.pattern.permute.xlu0 1
        %752 = vperm.xlu0 %751, %v727
        %v753 = vpop.permute.xlu0 %752
        %v755 = vmul.f32 %v626, %v753
        %v756 = vsel %vm627, %v755, 0.0
        %v757 = vrot.slane %v756, 4
        %v758 = vadd.f32 %v756, %v757
        %v759 = vrot.slane %v758, 2
        %v760 = vadd.f32 %v758, %v759
        %v761 = vrot.slane %v760, 1
        %v762 = vadd.f32 %v760, %v761
        %v763 = vadd.f32 %v750, %v762
        %764 = vset.pattern.permute.xlu0 2
        %765 = vperm.xlu0 %764, %v727
        %v766 = vpop.permute.xlu0 %765
        %v768 = vmul.f32 %v626, %v766
        %v769 = vsel %vm627, %v768, 0.0
        %v770 = vrot.slane %v769, 4
        %v771 = vadd.f32 %v769, %v770
        %v772 = vrot.slane %v771, 2
        %v773 = vadd.f32 %v771, %v772
        %v774 = vrot.slane %v773, 1
        %v775 = vadd.f32 %v773, %v774
        %777 = vrot.lane.b32.xlu0 %v775, 127
        %v778 = vpop.permute.xlu0 %777
        %780 = vrot.lane.b32.xlu0 %v775, 3
        %v781 = vpop.permute.xlu0 %780
        %vm783 = vcmask 23552
        %v784 = vsel %vm783, %v778, %v781
        %v785 = vadd.f32 %v763, %v784
        %787 = vset.pattern.permute.xlu0 0
        %788 = vperm.xlu0 %787, %v728
        %v789 = vpop.permute.xlu0 %788
        %v791 = vmul.f32 %v626, %v789
        %v792 = vsel %vm627, %v791, 0.0
        %v793 = vrot.slane %v792, 4
        %v794 = vadd.f32 %v792, %v793
        %v795 = vrot.slane %v794, 2
        %v796 = vadd.f32 %v794, %v795
        %v797 = vrot.slane %v796, 1
        %v798 = vadd.f32 %v796, %v797
        %800 = vrot.lane.b32.xlu0 %v798, 125
        %v801 = vpop.permute.xlu0 %800
        %803 = vrot.lane.b32.xlu0 %v798, 1
        %v804 = vpop.permute.xlu0 %803
        %v806 = vsel %vm749, %v801, %v804
        %807 = vset.pattern.permute.xlu0 1
        %808 = vperm.xlu0 %807, %v728
        %v809 = vpop.permute.xlu0 %808
        %v811 = vmul.f32 %v626, %v809
        %v812 = vsel %vm627, %v811, 0.0
        %v813 = vrot.slane %v812, 4
        %v814 = vadd.f32 %v812, %v813
        %v815 = vrot.slane %v814, 2
        %v816 = vadd.f32 %v814, %v815
        %v817 = vrot.slane %v816, 1
        %v818 = vadd.f32 %v816, %v817
        %v819 = vadd.f32 %v806, %v818
        %820 = vset.pattern.permute.xlu0 2
        %821 = vperm.xlu0 %820, %v728
        %v822 = vpop.permute.xlu0 %821
        %v824 = vmul.f32 %v626, %v822
        %v825 = vsel %vm627, %v824, 0.0
        %v826 = vrot.slane %v825, 4
        %v827 = vadd.f32 %v825, %v826
        %v828 = vrot.slane %v827, 2
        %v829 = vadd.f32 %v827, %v828
        %v830 = vrot.slane %v829, 1
        %v831 = vadd.f32 %v829, %v830
        %833 = vrot.lane.b32.xlu0 %v831, 127
        %v834 = vpop.permute.xlu0 %833
        %836 = vrot.lane.b32.xlu0 %v831, 3
        %v837 = vpop.permute.xlu0 %836
        %v839 = vsel %vm783, %v834, %v837
        %v840 = vadd.f32 %v819, %v839
        %v841 = vrsqrt.pop %v647
        %v842 = vmul.f32 %v647, %v841
        %vm843 = vcmp.eq.f32.partialorder %v647, inf
        %v844 = vsel %vm843, %v647, %v842
        %vm845 = vcmp.eq.f32.partialorder %v647, 0.0
        %v846 = vand.u32 %v647, 2147483648
        %v847 = vsel %vm845, %v846, %v844
        %849 = vrot.lane.b32.xlu0 %v847, 4
        %v850 = vpop.permute.xlu0 %849
        %v852 = vsel %vm627, %v785, %v850
        %v853 = vld [vmem:[%s5] sm:$0xff]
        %v854 = vld [vmem:[%s6] sm:$0x1]
        %v855 = vld [vmem:[%s7] sm:$0xff]
        %v856 = vld [vmem:[%s7 + $0x8] sm:$0xff]
        %v857 = vld [vmem:[%s8] sm:$0x1]
        %v858 = vld [vmem:[%s9] sm:$0xff]
        %v859 = vld [vmem:[%s9 + $0x8] sm:$0xff]
        %vm860 = vcmask 64512
        %v862 = vsel %vm860, %v852, 0
        %864 = vmatprep.subr.mxu0 0.0
        %865 = vmatpush1.msra.mxu0 0.0
        %866 = vmatprep.subr.mxu0 0.0
        %867 = vmatpush1.msra.mxu0 0.0
        %868 = vmatprep.subr.mxu0 0.0
        %869 = vmatpush1.msra.mxu0 0.0
        %870 = vmatprep.subr.mxu0 0.0
        %871 = vmatpush1.msra.mxu0 0.0
        %872 = vmatprep.subr.mxu0 0.0
        %873 = vmatpush1.msra.mxu0 0.0
        %874 = vmatprep.subr.mxu0 0.0
        %875 = vmatpush1.msra.mxu0 0.0
        %876 = vmatprep.subr.mxu0 0.0
        %877 = vmatpush1.msra.mxu0 0.0
        %878 = vmatprep.subr.mxu0 0.0
        %879 = vmatpush1.msra.mxu0 0.0
        %880 = vmatprep.subr.mxu0 0.0
        %881 = vmatpush1.msra.mxu0 0.0
        %882 = vmatprep.subr.mxu0 0.0
        %883 = vmatpush1.msra.mxu0 0.0
        %884 = vmatprep.subr.mxu0 0.0
        %885 = vmatpush1.msra.mxu0 0.0
        %886 = vmatprep.subr.mxu0 0.0
        %887 = vmatpush1.msra.mxu0 0.0
        %888 = vmatprep.subr.mxu0 0.0
        %889 = vmatpush1.msra.mxu0 0.0
        %890 = vmatprep.subr.mxu0 0.0
        %891 = vmatpush1.msra.mxu0 0.0
        %892 = vmatprep.subr.mxu0 0.0
        %893 = vmatpush1.msra.mxu0 0.0
        %894 = vmatprep.subr.mxu0 0.0
        %895 = vmatpush1.msra.mxu0 %v853
        %896 = vmatprep.subr.mxu0 0.0
        %897 = vmatpush2.msra.mxu0 0.0
        %898 = vmatprep.subr.mxu0 0.0
        %899 = vmatpush2.msra.mxu0 0.0
        %900 = vmatprep.subr.mxu0 0.0
        %901 = vmatpush2.msra.mxu0 0.0
        %902 = vmatprep.subr.mxu0 0.0
        %903 = vmatpush2.msra.mxu0 0.0
        %904 = vmatprep.subr.mxu0 0.0
        %905 = vmatpush2.msra.mxu0 0.0
        %906 = vmatprep.subr.mxu0 0.0
        %907 = vmatpush2.msra.mxu0 0.0
        %908 = vmatprep.subr.mxu0 0.0
        %909 = vmatpush2.msra.mxu0 0.0
        %910 = vmatprep.subr.mxu0 0.0
        %911 = vmatpush2.msra.mxu0 0.0
        %912 = vmatprep.subr.mxu0 0.0
        %913 = vmatpush2.msra.mxu0 0.0
        %914 = vmatprep.subr.mxu0 0.0
        %915 = vmatpush2.msra.mxu0 0.0
        %916 = vmatprep.subr.mxu0 0.0
        %917 = vmatpush2.msra.mxu0 0.0
        %918 = vmatprep.subr.mxu0 0.0
        %919 = vmatpush2.msra.mxu0 0.0
        %920 = vmatprep.subr.mxu0 0.0
        %921 = vmatpush2.msra.mxu0 0.0
        %922 = vmatprep.subr.mxu0 0.0
        %923 = vmatpush2.msra.mxu0 0.0
        %924 = vmatprep.subr.mxu0 0.0
        %925 = vmatpush2.msra.mxu0 0.0
        %926 = vmatprep.subr.mxu0 0.0
        %927 = vmatpush2.msra.mxu0 0.0
        %928 = vmatprep.mubr.f32.mxu0 0.0
        %929 = vmatmul.mubr.f32.gmra.mxu0 %v862
        %v930 = vpop.f32.mrf.mxu0
        %v931 = vadd.f32 %v854, %v930
        %v932 = vpop.f32.mrf.mxu0
        %933 = vdwg.mxu0
        %v934 = vmax.f32 %v931, 0.0
        %vm935 = vcmask 130048
        %v937 = vsel %vm935, %v934, 0
        %939 = vmatprep.subr.mxu0 0.0
        %940 = vmatpush1.msra.mxu0 0.0
        %941 = vmatprep.subr.mxu0 0.0
        %942 = vmatpush1.msra.mxu0 0.0
        %943 = vmatprep.subr.mxu0 0.0
        %944 = vmatpush1.msra.mxu0 0.0
        %945 = vmatprep.subr.mxu0 0.0
        %946 = vmatpush1.msra.mxu0 0.0
        %947 = vmatprep.subr.mxu0 0.0
        %948 = vmatpush1.msra.mxu0 0.0
        %949 = vmatprep.subr.mxu0 0.0
        %950 = vmatpush1.msra.mxu0 0.0
        %951 = vmatprep.subr.mxu0 0.0
        %952 = vmatpush1.msra.mxu0 0.0
        %953 = vmatprep.subr.mxu0 0.0
        %954 = vmatpush1.msra.mxu0 0.0
        %955 = vmatprep.subr.mxu0 0.0
        %956 = vmatpush1.msra.mxu0 0.0
        %957 = vmatprep.subr.mxu0 0.0
        %958 = vmatpush1.msra.mxu0 0.0
        %959 = vmatprep.subr.mxu0 0.0
        %960 = vmatpush1.msra.mxu0 0.0
        %961 = vmatprep.subr.mxu0 0.0
        %962 = vmatpush1.msra.mxu0 0.0
        %963 = vmatprep.subr.mxu0 0.0
        %964 = vmatpush1.msra.mxu0 0.0
        %965 = vmatprep.subr.mxu0 0.0
        %966 = vmatpush1.msra.mxu0 0.0
        %967 = vmatprep.subr.mxu0 0.0
        %968 = vmatpush1.msra.mxu0 %v856
        %969 = vmatprep.subr.mxu0 0.0
        %970 = vmatpush1.msra.mxu0 %v855
        %971 = vmatprep.subr.mxu0 0.0
        %972 = vmatpush2.msra.mxu0 0.0
        %973 = vmatprep.subr.mxu0 0.0
        %974 = vmatpush2.msra.mxu0 0.0
        %975 = vmatprep.subr.mxu0 0.0
        %976 = vmatpush2.msra.mxu0 0.0
        %977 = vmatprep.subr.mxu0 0.0
        %978 = vmatpush2.msra.mxu0 0.0
        %979 = vmatprep.subr.mxu0 0.0
        %980 = vmatpush2.msra.mxu0 0.0
        %981 = vmatprep.subr.mxu0 0.0
        %982 = vmatpush2.msra.mxu0 0.0
        %983 = vmatprep.subr.mxu0 0.0
        %984 = vmatpush2.msra.mxu0 0.0
        %985 = vmatprep.subr.mxu0 0.0
        %986 = vmatpush2.msra.mxu0 0.0
        %987 = vmatprep.subr.mxu0 0.0
        %988 = vmatpush2.msra.mxu0 0.0
        %989 = vmatprep.subr.mxu0 0.0
        %990 = vmatpush2.msra.mxu0 0.0
        %991 = vmatprep.subr.mxu0 0.0
        %992 = vmatpush2.msra.mxu0 0.0
        %993 = vmatprep.subr.mxu0 0.0
        %994 = vmatpush2.msra.mxu0 0.0
        %995 = vmatprep.subr.mxu0 0.0
        %996 = vmatpush2.msra.mxu0 0.0
        %997 = vmatprep.subr.mxu0 0.0
        %998 = vmatpush2.msra.mxu0 0.0
        %999 = vmatprep.subr.mxu0 0.0
        %1000 = vmatpush2.msra.mxu0 0.0
        %1001 = vmatprep.subr.mxu0 0.0
        %1002 = vmatpush2.msra.mxu0 0.0
        %1003 = vmatprep.mubr.f32.mxu0 0.0
        %1004 = vmatmul.mubr.f32.gmra.mxu0 %v937
        %v1005 = vpop.f32.mrf.mxu0
        %v1006 = vadd.f32 %v857, %v1005
        %v1007 = vpop.f32.mrf.mxu0
        %1008 = vdwg.mxu0
        %v1009 = vmax.f32 %v1006, 0.0
        %v1011 = vsel %vm935, %v1009, 0
        %1013 = vmatprep.subr.mxu0 0.0
        %1014 = vmatpush1.msra.mxu0 0.0
        %1015 = vmatprep.subr.mxu0 0.0
        %1016 = vmatpush1.msra.mxu0 0.0
        %1017 = vmatprep.subr.mxu0 0.0
        %1018 = vmatpush1.msra.mxu0 0.0
        %1019 = vmatprep.subr.mxu0 0.0
        %1020 = vmatpush1.msra.mxu0 0.0
        %1021 = vmatprep.subr.mxu0 0.0
        %1022 = vmatpush1.msra.mxu0 0.0
        %1023 = vmatprep.subr.mxu0 0.0
        %1024 = vmatpush1.msra.mxu0 0.0
        %1025 = vmatprep.subr.mxu0 0.0
        %1026 = vmatpush1.msra.mxu0 0.0
        %1027 = vmatprep.subr.mxu0 0.0
        %1028 = vmatpush1.msra.mxu0 0.0
        %1029 = vmatprep.subr.mxu0 0.0
        %1030 = vmatpush1.msra.mxu0 0.0
        %1031 = vmatprep.subr.mxu0 0.0
        %1032 = vmatpush1.msra.mxu0 0.0
        %1033 = vmatprep.subr.mxu0 0.0
        %1034 = vmatpush1.msra.mxu0 0.0
        %1035 = vmatprep.subr.mxu0 0.0
        %1036 = vmatpush1.msra.mxu0 0.0
        %1037 = vmatprep.subr.mxu0 0.0
        %1038 = vmatpush1.msra.mxu0 0.0
        %1039 = vmatprep.subr.mxu0 0.0
        %1040 = vmatpush1.msra.mxu0 0.0
        %1041 = vmatprep.subr.mxu0 0.0
        %1042 = vmatpush1.msra.mxu0 %v859
        %1043 = vmatprep.subr.mxu0 0.0
        %1044 = vmatpush1.msra.mxu0 %v858
        %1045 = vmatprep.subr.mxu0 0.0
        %1046 = vmatpush2.msra.mxu0 0.0
        %1047 = vmatprep.subr.mxu0 0.0
        %1048 = vmatpush2.msra.mxu0 0.0
        %1049 = vmatprep.subr.mxu0 0.0
        %1050 = vmatpush2.msra.mxu0 0.0
        %1051 = vmatprep.subr.mxu0 0.0
        %1052 = vmatpush2.msra.mxu0 0.0
        %1053 = vmatprep.subr.mxu0 0.0
        %1054 = vmatpush2.msra.mxu0 0.0
        %1055 = vmatprep.subr.mxu0 0.0
        %1056 = vmatpush2.msra.mxu0 0.0
        %1057 = vmatprep.subr.mxu0 0.0
        %1058 = vmatpush2.msra.mxu0 0.0
        %1059 = vmatprep.subr.mxu0 0.0
        %1060 = vmatpush2.msra.mxu0 0.0
        %1061 = vmatprep.subr.mxu0 0.0
        %1062 = vmatpush2.msra.mxu0 0.0
        %1063 = vmatprep.subr.mxu0 0.0
        %1064 = vmatpush2.msra.mxu0 0.0
        %1065 = vmatprep.subr.mxu0 0.0
        %1066 = vmatpush2.msra.mxu0 0.0
        %1067 = vmatprep.subr.mxu0 0.0
        %1068 = vmatpush2.msra.mxu0 0.0
        %1069 = vmatprep.subr.mxu0 0.0
        %1070 = vmatpush2.msra.mxu0 0.0
        %1071 = vmatprep.subr.mxu0 0.0
        %1072 = vmatpush2.msra.mxu0 0.0
        %1073 = vmatprep.subr.mxu0 0.0
        %1074 = vmatpush2.msra.mxu0 0.0
        %1075 = vmatprep.subr.mxu0 0.0
        %1076 = vmatpush2.msra.mxu0 0.0
        %1077 = vmatprep.mubr.f32.mxu0 0.0
        %1078 = vmatmul.mubr.f32.gmra.mxu0 %v1011
        %v1079 = vpop.f32.mrf.mxu0
        %v1080 = vadd.f32 0.0, %v1079
        %v1081 = vpop.f32.mrf.mxu0
        %1082 = vdwg.mxu0
        %1084 = vrot.lane.b32.xlu0 %v636, 4
        %v1085 = vpop.permute.xlu0 %1084
        %v1087 = vsel %vm627, %v840, %v1085
        %v1088 = vld [vmem:[%s11] sm:$0xff]
        %v1089 = vld [vmem:[%s12] sm:$0x1]
        %v1090 = vld [vmem:[%s13] sm:$0xff]
        %v1091 = vld [vmem:[%s13 + $0x8] sm:$0xff]
        %v1092 = vld [vmem:[%s14] sm:$0x1]
        %v1093 = vld [vmem:[%s15] sm:$0xff]
        %v1094 = vld [vmem:[%s15 + $0x8] sm:$0xff]
        %v1096 = vsel %vm860, %v1087, 0
        %1098 = vmatprep.subr.mxu0 0.0
        %1099 = vmatpush1.msra.mxu0 0.0
        %1100 = vmatprep.subr.mxu0 0.0
        %1101 = vmatpush1.msra.mxu0 0.0
        %1102 = vmatprep.subr.mxu0 0.0
        %1103 = vmatpush1.msra.mxu0 0.0
        %1104 = vmatprep.subr.mxu0 0.0
        %1105 = vmatpush1.msra.mxu0 0.0
        %1106 = vmatprep.subr.mxu0 0.0
        %1107 = vmatpush1.msra.mxu0 0.0
        %1108 = vmatprep.subr.mxu0 0.0
        %1109 = vmatpush1.msra.mxu0 0.0
        %1110 = vmatprep.subr.mxu0 0.0
        %1111 = vmatpush1.msra.mxu0 0.0
        %1112 = vmatprep.subr.mxu0 0.0
        %1113 = vmatpush1.msra.mxu0 0.0
        %1114 = vmatprep.subr.mxu0 0.0
        %1115 = vmatpush1.msra.mxu0 0.0
        %1116 = vmatprep.subr.mxu0 0.0
        %1117 = vmatpush1.msra.mxu0 0.0
        %1118 = vmatprep.subr.mxu0 0.0
        %1119 = vmatpush1.msra.mxu0 0.0
        %1120 = vmatprep.subr.mxu0 0.0
        %1121 = vmatpush1.msra.mxu0 0.0
        %1122 = vmatprep.subr.mxu0 0.0
        %1123 = vmatpush1.msra.mxu0 0.0
        %1124 = vmatprep.subr.mxu0 0.0
        %1125 = vmatpush1.msra.mxu0 0.0
        %1126 = vmatprep.subr.mxu0 0.0
        %1127 = vmatpush1.msra.mxu0 0.0
        %1128 = vmatprep.subr.mxu0 0.0
        %1129 = vmatpush1.msra.mxu0 %v1088
        %1130 = vmatprep.subr.mxu0 0.0
        %1131 = vmatpush2.msra.mxu0 0.0
        %1132 = vmatprep.subr.mxu0 0.0
        %1133 = vmatpush2.msra.mxu0 0.0
        %1134 = vmatprep.subr.mxu0 0.0
        %1135 = vmatpush2.msra.mxu0 0.0
        %1136 = vmatprep.subr.mxu0 0.0
        %1137 = vmatpush2.msra.mxu0 0.0
        %1138 = vmatprep.subr.mxu0 0.0
        %1139 = vmatpush2.msra.mxu0 0.0
        %1140 = vmatprep.subr.mxu0 0.0
        %1141 = vmatpush2.msra.mxu0 0.0
        %1142 = vmatprep.subr.mxu0 0.0
        %1143 = vmatpush2.msra.mxu0 0.0
        %1144 = vmatprep.subr.mxu0 0.0
        %1145 = vmatpush2.msra.mxu0 0.0
        %1146 = vmatprep.subr.mxu0 0.0
        %1147 = vmatpush2.msra.mxu0 0.0
        %1148 = vmatprep.subr.mxu0 0.0
        %1149 = vmatpush2.msra.mxu0 0.0
        %1150 = vmatprep.subr.mxu0 0.0
        %1151 = vmatpush2.msra.mxu0 0.0
        %1152 = vmatprep.subr.mxu0 0.0
        %1153 = vmatpush2.msra.mxu0 0.0
        %1154 = vmatprep.subr.mxu0 0.0
        %1155 = vmatpush2.msra.mxu0 0.0
        %1156 = vmatprep.subr.mxu0 0.0
        %1157 = vmatpush2.msra.mxu0 0.0
        %1158 = vmatprep.subr.mxu0 0.0
        %1159 = vmatpush2.msra.mxu0 0.0
        %1160 = vmatprep.subr.mxu0 0.0
        %1161 = vmatpush2.msra.mxu0 0.0
        %1162 = vmatprep.mubr.f32.mxu0 0.0
        %1163 = vmatmul.mubr.f32.gmra.mxu0 %v1096
        %v1164 = vpop.f32.mrf.mxu0
        %v1165 = vadd.f32 %v1089, %v1164
        %v1166 = vpop.f32.mrf.mxu0
        %1167 = vdwg.mxu0
        %v1168 = vmax.f32 %v1165, 0.0
        %v1170 = vsel %vm935, %v1168, 0
        %1172 = vmatprep.subr.mxu0 0.0
        %1173 = vmatpush1.msra.mxu0 0.0
        %1174 = vmatprep.subr.mxu0 0.0
        %1175 = vmatpush1.msra.mxu0 0.0
        %1176 = vmatprep.subr.mxu0 0.0
        %1177 = vmatpush1.msra.mxu0 0.0
        %1178 = vmatprep.subr.mxu0 0.0
        %1179 = vmatpush1.msra.mxu0 0.0
        %1180 = vmatprep.subr.mxu0 0.0
        %1181 = vmatpush1.msra.mxu0 0.0
        %1182 = vmatprep.subr.mxu0 0.0
        %1183 = vmatpush1.msra.mxu0 0.0
        %1184 = vmatprep.subr.mxu0 0.0
        %1185 = vmatpush1.msra.mxu0 0.0
        %1186 = vmatprep.subr.mxu0 0.0
        %1187 = vmatpush1.msra.mxu0 0.0
        %1188 = vmatprep.subr.mxu0 0.0
        %1189 = vmatpush1.msra.mxu0 0.0
        %1190 = vmatprep.subr.mxu0 0.0
        %1191 = vmatpush1.msra.mxu0 0.0
        %1192 = vmatprep.subr.mxu0 0.0
        %1193 = vmatpush1.msra.mxu0 0.0
        %1194 = vmatprep.subr.mxu0 0.0
        %1195 = vmatpush1.msra.mxu0 0.0
        %1196 = vmatprep.subr.mxu0 0.0
        %1197 = vmatpush1.msra.mxu0 0.0
        %1198 = vmatprep.subr.mxu0 0.0
        %1199 = vmatpush1.msra.mxu0 0.0
        %1200 = vmatprep.subr.mxu0 0.0
        %1201 = vmatpush1.msra.mxu0 %v1091
        %1202 = vmatprep.subr.mxu0 0.0
        %1203 = vmatpush1.msra.mxu0 %v1090
        %1204 = vmatprep.subr.mxu0 0.0
        %1205 = vmatpush2.msra.mxu0 0.0
        %1206 = vmatprep.subr.mxu0 0.0
        %1207 = vmatpush2.msra.mxu0 0.0
        %1208 = vmatprep.subr.mxu0 0.0
        %1209 = vmatpush2.msra.mxu0 0.0
        %1210 = vmatprep.subr.mxu0 0.0
        %1211 = vmatpush2.msra.mxu0 0.0
        %1212 = vmatprep.subr.mxu0 0.0
        %1213 = vmatpush2.msra.mxu0 0.0
        %1214 = vmatprep.subr.mxu0 0.0
        %1215 = vmatpush2.msra.mxu0 0.0
        %1216 = vmatprep.subr.mxu0 0.0
        %1217 = vmatpush2.msra.mxu0 0.0
        %1218 = vmatprep.subr.mxu0 0.0
        %1219 = vmatpush2.msra.mxu0 0.0
        %1220 = vmatprep.subr.mxu0 0.0
        %1221 = vmatpush2.msra.mxu0 0.0
        %1222 = vmatprep.subr.mxu0 0.0
        %1223 = vmatpush2.msra.mxu0 0.0
        %1224 = vmatprep.subr.mxu0 0.0
        %1225 = vmatpush2.msra.mxu0 0.0
        %1226 = vmatprep.subr.mxu0 0.0
        %1227 = vmatpush2.msra.mxu0 0.0
        %1228 = vmatprep.subr.mxu0 0.0
        %1229 = vmatpush2.msra.mxu0 0.0
        %1230 = vmatprep.subr.mxu0 0.0
        %1231 = vmatpush2.msra.mxu0 0.0
        %1232 = vmatprep.subr.mxu0 0.0
        %1233 = vmatpush2.msra.mxu0 0.0
        %1234 = vmatprep.subr.mxu0 0.0
        %1235 = vmatpush2.msra.mxu0 0.0
        %1236 = vmatprep.mubr.f32.mxu0 0.0
        %1237 = vmatmul.mubr.f32.gmra.mxu0 %v1170
        %v1238 = vpop.f32.mrf.mxu0
        %v1239 = vadd.f32 %v1092, %v1238
        %v1240 = vpop.f32.mrf.mxu0
        %1241 = vdwg.mxu0
        %v1242 = vmax.f32 %v1239, 0.0
        %v1244 = vsel %vm935, %v1242, 0
        %1246 = vmatprep.subr.mxu0 0.0
        %1247 = vmatpush1.msra.mxu0 0.0
        %1248 = vmatprep.subr.mxu0 0.0
        %1249 = vmatpush1.msra.mxu0 0.0
        %1250 = vmatprep.subr.mxu0 0.0
        %1251 = vmatpush1.msra.mxu0 0.0
        %1252 = vmatprep.subr.mxu0 0.0
        %1253 = vmatpush1.msra.mxu0 0.0
        %1254 = vmatprep.subr.mxu0 0.0
        %1255 = vmatpush1.msra.mxu0 0.0
        %1256 = vmatprep.subr.mxu0 0.0
        %1257 = vmatpush1.msra.mxu0 0.0
        %1258 = vmatprep.subr.mxu0 0.0
        %1259 = vmatpush1.msra.mxu0 0.0
        %1260 = vmatprep.subr.mxu0 0.0
        %1261 = vmatpush1.msra.mxu0 0.0
        %1262 = vmatprep.subr.mxu0 0.0
        %1263 = vmatpush1.msra.mxu0 0.0
        %1264 = vmatprep.subr.mxu0 0.0
        %1265 = vmatpush1.msra.mxu0 0.0
        %1266 = vmatprep.subr.mxu0 0.0
        %1267 = vmatpush1.msra.mxu0 0.0
        %1268 = vmatprep.subr.mxu0 0.0
        %1269 = vmatpush1.msra.mxu0 0.0
        %1270 = vmatprep.subr.mxu0 0.0
        %1271 = vmatpush1.msra.mxu0 0.0
        %1272 = vmatprep.subr.mxu0 0.0
        %1273 = vmatpush1.msra.mxu0 0.0
        %1274 = vmatprep.subr.mxu0 0.0
        %1275 = vmatpush1.msra.mxu0 %v1094
        %1276 = vmatprep.subr.mxu0 0.0
        %1277 = vmatpush1.msra.mxu0 %v1093
        %1278 = vmatprep.subr.mxu0 0.0
        %1279 = vmatpush2.msra.mxu0 0.0
        %1280 = vmatprep.subr.mxu0 0.0
        %1281 = vmatpush2.msra.mxu0 0.0
        %1282 = vmatprep.subr.mxu0 0.0
        %1283 = vmatpush2.msra.mxu0 0.0
        %1284 = vmatprep.subr.mxu0 0.0
        %1285 = vmatpush2.msra.mxu0 0.0
        %1286 = vmatprep.subr.mxu0 0.0
        %1287 = vmatpush2.msra.mxu0 0.0
        %1288 = vmatprep.subr.mxu0 0.0
        %1289 = vmatpush2.msra.mxu0 0.0
        %1290 = vmatprep.subr.mxu0 0.0
        %1291 = vmatpush2.msra.mxu0 0.0
        %1292 = vmatprep.subr.mxu0 0.0
        %1293 = vmatpush2.msra.mxu0 0.0
        %1294 = vmatprep.subr.mxu0 0.0
        %1295 = vmatpush2.msra.mxu0 0.0
        %1296 = vmatprep.subr.mxu0 0.0
        %1297 = vmatpush2.msra.mxu0 0.0
        %1298 = vmatprep.subr.mxu0 0.0
        %1299 = vmatpush2.msra.mxu0 0.0
        %1300 = vmatprep.subr.mxu0 0.0
        %1301 = vmatpush2.msra.mxu0 0.0
        %1302 = vmatprep.subr.mxu0 0.0
        %1303 = vmatpush2.msra.mxu0 0.0
        %1304 = vmatprep.subr.mxu0 0.0
        %1305 = vmatpush2.msra.mxu0 0.0
        %1306 = vmatprep.subr.mxu0 0.0
        %1307 = vmatpush2.msra.mxu0 0.0
        %1308 = vmatprep.subr.mxu0 0.0
        %1309 = vmatpush2.msra.mxu0 0.0
        %1310 = vmatprep.mubr.f32.mxu0 0.0
        %1311 = vmatmul.mubr.f32.gmra.mxu0 %v1244
        %v1312 = vpop.f32.mrf.mxu0
        %v1313 = vadd.f32 0.0, %v1312
        %v1314 = vpop.f32.mrf.mxu0
        %1315 = vdwg.mxu0
        %v1316 = vmul.f32 %v1080, 1.442695
        %v1317 = vpow.pop %v1316
        %vm1318 = vcmask 0
        %1319 = vst.msk [vmem:[%s625] sm:$0x1] %vm1318, %v1317
        %vm1320 = vcmask 57344
        %1321 = vst.msk [vmem:[%s610] sm:$0x1] %vm1320, %v1313
        %p1322 = scmp.lt.s32.totalorder %s34, 1
        %s1323 = scalar_select %p1322, %s34, 1
        %s1324 = smul.addr %s1323, 8
        %s1325 = scalar_lea.vmem %s16, %s1324
        %p1326 = scmp.lt.s32.totalorder %s34, 1
        %s1327 = scalar_select %p1326, %s34, 1
        %s1328 = smul.addr %s1327, 8
        %s1329 = scalar_lea.vmem %s17, %s1328
        %p1330 = scmp.lt.s32.totalorder %s34, 1
        %s1331 = scalar_select %p1330, %s34, 1
        %s1332 = scalar_lea.vmem %s18, %s1331
        %s1333 = sand.u32 %s461, 1
        %s1334 = scalar_lea.sflag [#allocation3], %s1333
        %s1335 = sand.u32 %s461, 1
        %s1336 = scalar_lea.vmem [#allocation2], %s1335
        // Predicated region
        $region85: #{dish_forward.1} parent=83 // pred_check
          %p1337 = pneg %p393
        $region86: #{dish_forward.1} parent=83 // pred_check_branch
          %1339 = sbr.rel (%p1337) target = $region88
        $region87: #{dish_forward.1} parent=83 // pred_region
          _
        $region88: #{dish_forward.1} parent=83 // pred_fallthru
          _
        // Predicated region
        $region89: #{dish_forward.1} parent=83 // pred_check
          %p1340 = pneg %p419
        $region90: #{dish_forward.1} parent=83 // pred_check_branch
          %1342 = sbr.rel (%p1340) target = $region92
        $region91: #{dish_forward.1} parent=83 // pred_region
          _
        $region92: #{dish_forward.1} parent=83 // pred_fallthru
          _
        // Predicated region
        $region93: #{dish_forward.1} parent=83 // pred_check
          %p1343 = pneg %p445
        $region94: #{dish_forward.1} parent=83 // pred_check_branch
          %1345 = sbr.rel (%p1343) target = $region96
        $region95: #{dish_forward.1} parent=83 // pred_region
          _
        $region96: #{dish_forward.1} parent=83 // pred_fallthru
          _
        // Predicated region
        $region97: #{dish_forward.1} parent=83 // pred_check
          %p1346 = pneg %p471
        $region98: #{dish_forward.1} parent=83 // pred_check_branch
          %1348 = sbr.rel (%p1346) target = $region100
        $region99: #{dish_forward.1} parent=83 // pred_region
          %s1350 = ssub.s32 16, 16
          %1351 = vsyncadd %s1334, %s1350
          %s1352 = smul.addr %s34, 16
          %s1353 = scalar_lea.hbm %s19, %s1352
          %s1355 = sshll.u32 %s1336, 4
          %s1356 = int_to_ptr.vmem [resolvable:$true] %s1355
          %1358 = dma.vmem_to_hbm [thread:$0]  %s1356, 16, %s1353, %s1334
        $region100: #{dish_forward.1} parent=83 // pred_fallthru
          _
      $region84: #{dish_forward.1} parent=5 // pred_fallthru
        _
      %p1359 = scmp.le.s32.totalorder 2, %s29
      // Predicated region
      $region101: #{dish_forward.1} parent=5 // pred_check
        %p1360 = pneg %p1359
      $region102: #{dish_forward.1} parent=5 // pred_check_branch
        %1362 = sbr.rel (%p1360) target = $region104
      $region103: #{dish_forward.1} parent=5 // pred_region
        %s1363 = ssub.s32 %s29, 2
        // Predicated region
        $region105: #{dish_forward.1} parent=103 // pred_check
          %p1364 = pneg %p399
        $region106: #{dish_forward.1} parent=103 // pred_check_branch
          %1366 = sbr.rel (%p1364) target = $region108
        $region107: #{dish_forward.1} parent=103 // pred_region
          %p1367 = scmp.lt.s32.totalorder %s35, 1
          %s1368 = scalar_select %p1367, %s35, 1
          %s1369 = smul.addr %s1368, 8
          %s1370 = scalar_lea.vmem %s16, %s1369
        $region108: #{dish_forward.1} parent=103 // pred_fallthru
          _
        // Predicated region
        $region109: #{dish_forward.1} parent=103 // pred_check
          %p1371 = pneg %p425
        $region110: #{dish_forward.1} parent=103 // pred_check_branch
          %1373 = sbr.rel (%p1371) target = $region112
        $region111: #{dish_forward.1} parent=103 // pred_region
          %p1374 = scmp.lt.s32.totalorder %s35, 1
          %s1375 = scalar_select %p1374, %s35, 1
          %s1376 = smul.addr %s1375, 8
          %s1377 = scalar_lea.vmem %s17, %s1376
        $region112: #{dish_forward.1} parent=103 // pred_fallthru
          _
        // Predicated region
        $region113: #{dish_forward.1} parent=103 // pred_check
          %p1378 = pneg %p451
        $region114: #{dish_forward.1} parent=103 // pred_check_branch
          %1380 = sbr.rel (%p1378) target = $region116
        $region115: #{dish_forward.1} parent=103 // pred_region
          %p1381 = scmp.lt.s32.totalorder %s35, 1
          %s1382 = scalar_select %p1381, %s35, 1
          %s1383 = scalar_lea.vmem %s18, %s1382
        $region116: #{dish_forward.1} parent=103 // pred_fallthru
          _
        // Predicated region
        $region117: #{dish_forward.1} parent=103 // pred_check
          %p1384 = pneg %p477
        $region118: #{dish_forward.1} parent=103 // pred_check_branch
          %1386 = sbr.rel (%p1384) target = $region120
        $region119: #{dish_forward.1} parent=103 // pred_region
          %s1387 = sand.u32 %s462, 1
          %s1388 = scalar_lea.sflag [#allocation3], %s1387
          %s1389 = sand.u32 %s462, 1
          %s1390 = scalar_lea.vmem [#allocation2], %s1389
          %1391 = dma.done %s1388, 16
        $region120: #{dish_forward.1} parent=103 // pred_fallthru
          _
      $region104: #{dish_forward.1} parent=5 // pred_fallthru
        _
    $region6: #{dish_forward.1} parent=1 // loop_footer
      %s33 = sadd.s32 1, %s29
    $region7: #{dish_forward.1} parent=1 // loop_footer_branch
      %28 = sbr.rel target = $region3
    $region8: #{dish_forward.1} parent=1 // loop_exit
      _
    %1392 = vsyncpa [#allocation3], 1
    %s1393 = scalar_lea.sflag [#allocation3], 1
    %1394 = vsyncpa %s1393, 1

</llo_original>
